<compile_context>
chip_gen: v5e
topology: v5e:2x2
jax: 0.10.0
libtpu: 0.0.40
codegen_flags: <defaults>
</compile_context>

<pallas_src>
import functools

import jax
import jax.numpy as jnp
from jax.experimental import pallas as pl
from jax.experimental.pallas import tpu as pltpu

_MATMUL_DTYPE = jnp.bfloat16   # MXU operand dtype; accumulation stays f32.


# ---------------------------------------------------------------------------
# Kernels
# ---------------------------------------------------------------------------
def _satellite_kernel(hx_ref, e_ref, s_ref,
                      whx_ref, bhx_ref, wkv_ref, bkv_ref,
                      wfc_ref, bfc_ref, gamma_ref, beta_ref,
                      sk_ref, ev_ref, out_ref,
                      *, n_head, d_k, d_v):
    """Satellite-node update for a tile of TB batches x L tokens.

    hx_ref : (TB, L+2, D)  per-batch zero-padded h   (the h_extand of the ref)
    e_ref  : (TB, L, D)    token embeddings
    s_ref  : (TB, 1, D)    relay node
    out    : (TB, L, D)    new satellite states
    """
    TB, Lp2, D = hx_ref.shape
    L = Lp2 - 2
    rows = TB * L
    Hdk = n_head * d_k
    Hdv = n_head * d_v
    Hkv = Hdk + Hdv
    inv_temp = 1.0 / (float(d_k) ** 0.5)
    f32 = jnp.float32

    # ---- fused Q/K/V projection of the padded h block (one MXU pass) -------
    hx2 = hx_ref[...].reshape(TB * Lp2, D).astype(_MATMUL_DTYPE)
    proj = jnp.dot(hx2, whx_ref[...], preferred_element_type=f32) + bhx_ref[...]
    proj = proj.reshape(TB, Lp2, Hdk + Hkv)

    qp    = proj[:, 1:L + 1, :Hdk].reshape(rows, Hdk)      # queries (center)
    kv_m1 = proj[:, 0:L,     Hdk:].reshape(rows, Hkv)      # left neighbour K|V
    kv_c0 = proj[:, 1:L + 1, Hdk:].reshape(rows, Hkv)      # token itself  K|V
    kv_p1 = proj[:, 2:L + 2, Hdk:].reshape(rows, Hkv)      # right neighbour K|V

    # ---- fused K/V projection of e and s ------------------------------------
    e2 = e_ref[...].reshape(rows, D).astype(_MATMUL_DTYPE)
    kv_e = jnp.dot(e2, wkv_ref[...], preferred_element_type=f32) + bkv_ref[...]

    s2 = s_ref[...][:, 0, :].astype(_MATMUL_DTYPE)          # (TB, D)
    kv_s_b = jnp.dot(s2, wkv_ref[...], preferred_element_type=f32) + bkv_ref[...]
    kv_s = jnp.broadcast_to(kv_s_b[:, None, :], (TB, L, Hkv)).reshape(rows, Hkv)

    sources = (kv_m1, kv_c0, kv_p1, kv_e, kv_s)              # Lk = 5

    sk = sk_ref[...]    # (Hdk, H) 0/1: segmented per-head sum of q*k products
    ev = ev_ref[...]    # (H, Hdv) 0/1: expand per-head prob to d_v lanes

    # ---- head-batched scaled dot-product scores + softmax over 5 sources ----
    scores = []
    for kv_c in sources:
        k_c = kv_c[:, :Hdk]
        scores.append(jnp.dot(qp * k_c, sk, preferred_element_type=f32)
                      * inv_temp)                             # (rows, H)
    m = scores[0]
    for sc in scores[1:]:
        m = jnp.maximum(m, sc)
    exps = [jnp.exp(sc - m) for sc in scores]
    denom = exps[0]
    for ex in exps[1:]:
        denom = denom + ex
    inv_denom = pl.reciprocal(denom, approx=True)             # (rows, H)

    head_out = jnp.zeros((rows, Hdv), dtype=f32)
    for ex, kv_c in zip(exps, sources):
        p_exp = jnp.dot(ex * inv_denom, ev, preferred_element_type=f32)
        head_out = head_out + p_exp * kv_c[:, Hdk:]           # (rows, Hdv)

    # ---- fc + ReLU + LayerNorm (use_star=True path, no residual) ------------
    o = jnp.dot(head_out.astype(_MATMUL_DTYPE), wfc_ref[...],
                preferred_element_type=f32) + bfc_ref[...]
    o = jnp.maximum(o, 0.0)
    mean = jnp.mean(o, axis=-1, keepdims=True)
    var = jnp.mean((o - mean) ** 2, axis=-1, keepdims=True)
    o = (o - mean) * jax.lax.rsqrt(var + 1e-5)
    o = o * gamma_ref[...] + beta_ref[...]
    out_ref[...] = o.reshape(TB, L, D).astype(out_ref.dtype)


def _relay_kernel(s_ref, h_ref,
                  wq_ref, bq_ref, wkv_ref, bkv_ref,
                  wfc_ref, bfc_ref, gamma_ref, beta_ref,
                  sk_ref, ev_ref, out_ref,
                  *, n_head, d_k, d_v):
    """Relay-node update: each s[b] attends over [s[b], h[b, 0..L-1]]."""
    B, D = s_ref.shape
    _, L, _ = h_ref.shape
    Hdk = n_head * d_k
    Hdv = n_head * d_v
    inv_temp = 1.0 / (float(d_k) ** 0.5)
    f32 = jnp.float32

    s2 = s_ref[...].astype(_MATMUL_DTYPE)                     # (B, D)
    qp = jnp.dot(s2, wq_ref[...], preferred_element_type=f32) + bq_ref[...]

    kv_s = jnp.dot(s2, wkv_ref[...], preferred_element_type=f32) + bkv_ref[...]
    h2 = h_ref[...].reshape(B * L, D).astype(_MATMUL_DTYPE)
    kv_h = jnp.dot(h2, wkv_ref[...], preferred_element_type=f32) + bkv_ref[...]
    k_h = kv_h[:, :Hdk].reshape(B, L, Hdk)
    v_h = kv_h[:, Hdk:].reshape(B, L, Hdv)

    sk = sk_ref[...]
    ev = ev_ref[...]

    # TODO(synk): the L+1 source unroll is fine for small L; a large-L relay
    #             should batch the per-source math instead of unrolling.
    ks = [kv_s[:, :Hdk]] + [k_h[:, l, :] for l in range(L)]
    vs = [kv_s[:, Hdk:]] + [v_h[:, l, :] for l in range(L)]

    scores = [jnp.dot(qp * k_c, sk, preferred_element_type=f32) * inv_temp
              for k_c in ks]                                   # each (B, H)
    m = scores[0]
    for sc in scores[1:]:
        m = jnp.maximum(m, sc)
    exps = [jnp.exp(sc - m) for sc in scores]
    denom = exps[0]
    for ex in exps[1:]:
        denom = denom + ex
    inv_denom = pl.reciprocal(denom, approx=True)

    head_out = jnp.zeros((B, Hdv), dtype=f32)
    for ex, v_c in zip(exps, vs):
        p_exp = jnp.dot(ex * inv_denom, ev, preferred_element_type=f32)
        head_out = head_out + p_exp * v_c

    o = jnp.dot(head_out.astype(_MATMUL_DTYPE), wfc_ref[...],
                preferred_element_type=f32) + bfc_ref[...]
    o = jnp.maximum(o, 0.0)
    mean = jnp.mean(o, axis=-1, keepdims=True)
    var = jnp.mean((o - mean) ** 2, axis=-1, keepdims=True)
    o = (o - mean) * jax.lax.rsqrt(var + 1e-5)
    out_ref[...] = (o * gamma_ref[...] + beta_ref[...]).astype(out_ref.dtype)


# ---------------------------------------------------------------------------
# Wrappers
# ---------------------------------------------------------------------------
def _selector_matrices(n_head, d_k, d_v):
    Hdk, Hdv = n_head * d_k, n_head * d_v
    sk = (jnp.arange(Hdk)[:, None] // d_k
          == jnp.arange(n_head)[None, :]).astype(jnp.float32)         # (Hdk, H)
    ev = (jnp.arange(n_head)[:, None]
          == jnp.arange(Hdv)[None, :] // d_v).astype(jnp.float32)     # (H, Hdv)
    return sk, ev


def _fuse_params(params):
    """(wq,bq,wk,bk,wv,bv,wfc,bfc,gamma,beta) -> fused K|V weights, bf16 mats."""
    wq, bq, wk, bk, wv, bv, wfc, bfc, gamma, beta = params
    wkv = jnp.concatenate([wk, wv], axis=1)
    bkv = jnp.concatenate([bk, bv], axis=1)
    return (wq.astype(_MATMUL_DTYPE), bq,
            wkv.astype(_MATMUL_DTYPE), bkv,
            wfc.astype(_MATMUL_DTYPE), bfc, gamma, beta)


def _const_spec(a):
    return pl.BlockSpec(a.shape, lambda i: (0,) * a.ndim)


def star_satellite_update(h, e, s, params, n_head, d_k, d_v, *,
                          target_rows=256):
    """h: (B, L, D), e: (B, L, D), s: (B, D) -> h_new (B, L, D)."""
    B, L, D = h.shape
    wq, bq, wkv, bkv, wfc, bfc, gamma, beta = _fuse_params(params)
    whx = jnp.concatenate([wq, wkv], axis=1)      # (D, Hdk + Hkv), bf16
    bhx = jnp.concatenate([bq, bkv], axis=1)      # (1, Hdk + Hkv), f32
    sk, ev = _selector_matrices(n_head, d_k, d_v)

    # Per-batch zero pad of the sequence (== h_extand in the reference).
    h_ext = jnp.pad(h, ((0, 0), (1, 1), (0, 0)))
    s3 = s[:, None, :]

    # Batch tile: aim for ~target_rows query rows per grid step.
    tb = max(1, min(B, max(1, target_rows // max(L, 1))))
    while B % tb:
        tb -= 1
    grid = (B // tb,)

    kernel = functools.partial(_satellite_kernel,
                               n_head=n_head, d_k=d_k, d_v=d_v)
    return pl.pallas_call(
        kernel,
        out_shape=jax.ShapeDtypeStruct((B, L, D), jnp.float32),
        grid=grid,
        in_specs=[
            pl.BlockSpec((tb, L + 2, D), lambda i: (i, 0, 0)),
            pl.BlockSpec((tb, L, D), lambda i: (i, 0, 0)),
            pl.BlockSpec((tb, 1, D), lambda i: (i, 0, 0)),
            _const_spec(whx), _const_spec(bhx),
            _const_spec(wkv), _const_spec(bkv),
            _const_spec(wfc), _const_spec(bfc),
            _const_spec(gamma), _const_spec(beta),
            _const_spec(sk), _const_spec(ev),
        ],
        out_specs=pl.BlockSpec((tb, L, D), lambda i: (i, 0, 0)),
        compiler_params=pltpu.CompilerParams(
            dimension_semantics=("parallel",),
            vmem_limit_bytes=32 * 1024 * 1024),
    )(h_ext, e, s3, whx, bhx, wkv, bkv, wfc, bfc, gamma, beta, sk, ev)


def star_relay_update(s, h, params, n_head, d_k, d_v):
    """s: (B, D), h: (B, L, D) -> s_new (B, D)."""
    B, D = s.shape
    _, L, _ = h.shape
    wq, bq, wkv, bkv, wfc, bfc, gamma, beta = _fuse_params(params)
    sk, ev = _selector_matrices(n_head, d_k, d_v)

    kernel = functools.partial(_relay_kernel, n_head=n_head, d_k=d_k, d_v=d_v)
    return pl.pallas_call(
        kernel,
        out_shape=jax.ShapeDtypeStruct((B, D), jnp.float32),
        grid=(1,),
        in_specs=[
            pl.BlockSpec((B, D), lambda i: (0, 0)),
            pl.BlockSpec((B, L, D), lambda i: (0, 0, 0)),
            _const_spec(wq), _const_spec(bq),
            _const_spec(wkv), _const_spec(bkv),
            _const_spec(wfc), _const_spec(bfc),
            _const_spec(gamma), _const_spec(beta),
            _const_spec(sk), _const_spec(ev),
        ],
        out_specs=pl.BlockSpec((B, D), lambda i: (0, 0)),
        compiler_params=pltpu.CompilerParams(
            dimension_semantics=("arbitrary",),
            vmem_limit_bytes=32 * 1024 * 1024),
    )(s, h, wq, bq, wkv, bkv, wfc, bfc, gamma, beta, sk, ev)


def star_encoder_layer(h, e, s, params_sat, params_rel, n_head, d_k, d_v,
                       non_pad_mask=None):
    """h: (B, L, D), e: (B, L, D), s: (B, D) -> (h_new (B,L,D), s_new (B,D))."""
    h_new = star_satellite_update(h, e, s, params_sat, n_head, d_k, d_v)
    if non_pad_mask is not None:
        h_new = h_new * non_pad_mask
    s_new = star_relay_update(s, h_new, params_rel, n_head, d_k, d_v)
    return h_new, s_new


def init_mha_params(key, d_model, n_head, d_k, d_v):
    """Deterministic synthetic init matching the PyTorch parameter shapes."""
    ks = jax.random.split(key, 4)
    wq = jax.random.normal(ks[0], (d_model, n_head * d_k), jnp.float32) * (2.0 / (d_model + d_k)) ** 0.5
    wk = jax.random.normal(ks[1], (d_model, n_head * d_k), jnp.float32) * (2.0 / (d_model + d_k)) ** 0.5
    wv = jax.random.normal(ks[2], (d_model, n_head * d_v), jnp.float32) * (2.0 / (d_model + d_v)) ** 0.5
    wfc = jax.random.normal(ks[3], (n_head * d_v, d_model), jnp.float32) * 0.02
    bq = jnp.zeros((1, n_head * d_k), jnp.float32)
    bk = jnp.zeros((1, n_head * d_k), jnp.float32)
    bv = jnp.zeros((1, n_head * d_v), jnp.float32)
    bfc = jnp.zeros((1, d_model), jnp.float32)
    gamma = jnp.ones((1, d_model), jnp.float32)   # LayerNorm weight
    beta = jnp.zeros((1, d_model), jnp.float32)   # LayerNorm bias
    return (wq, bq, wk, bk, wv, bv, wfc, bfc, gamma, beta)


if __name__ == "__main__":
    B, L, D = 2, 8, 32
    n_head, d_k, d_v = 4, 8, 8

    key = jax.random.PRNGKey(0)
    k_h, k_e, k_s, k_p1, k_p2 = jax.random.split(key, 5)
    h = jax.random.normal(k_h, (B, L, D), jnp.float32)
    e = jax.random.normal(k_e, (B, L, D), jnp.float32)
    s = jax.random.normal(k_s, (B, D), jnp.float32)

    params_sat = init_mha_params(k_p1, D, n_head, d_k, d_v)
    params_rel = init_mha_params(k_p2, D, n_head, d_k, d_v)

    h_out, s_out = star_encoder_layer(h, e, s, params_sat, params_rel,
                                      n_head, d_k, d_v)
    jax.block_until_ready((h_out, s_out))

    assert h_out.shape == (B, L, D), h_out.shape
    assert s_out.shape == (B, D), s_out.shape
    assert bool(jnp.all(jnp.isfinite(h_out))) and bool(jnp.all(jnp.isfinite(s_out)))
    print("KERNEL_OK")
</pallas_src>

<mosaic_0001>
module attributes {stable_mosaic.version = 11 : i64} {
  func.func @_satellite_kernel(%arg0: i32, %arg1: memref<2x10x32xf32, #tpu.memory_space<vmem>>, %arg2: memref<2x8x32xf32, #tpu.memory_space<vmem>>, %arg3: memref<2x1x32xf32, #tpu.memory_space<vmem>>, %arg4: memref<32x96xbf16, #tpu.memory_space<vmem>>, %arg5: memref<1x96xf32, #tpu.memory_space<vmem>>, %arg6: memref<32x64xbf16, #tpu.memory_space<vmem>>, %arg7: memref<1x64xf32, #tpu.memory_space<vmem>>, %arg8: memref<32x32xbf16, #tpu.memory_space<vmem>>, %arg9: memref<1x32xf32, #tpu.memory_space<vmem>>, %arg10: memref<1x32xf32, #tpu.memory_space<vmem>>, %arg11: memref<1x32xf32, #tpu.memory_space<vmem>>, %arg12: memref<32x4xf32, #tpu.memory_space<vmem>>, %arg13: memref<4x32xf32, #tpu.memory_space<vmem>>, %arg14: memref<2x8x32xf32, #tpu.memory_space<vmem>>) attributes {dimension_semantics = [#tpu.dimension_semantics<parallel>], iteration_bounds = array<i64: 1>, scalar_prefetch = 0 : i64, scratch_operands = 0 : i64, tpu.core_type = #tpu.core_type<tc>, window_params = [{transform_indices = @transform_0, window_bounds = array<i64: 2, 10, 32>}, {transform_indices = @transform_1, window_bounds = array<i64: 2, 8, 32>}, {transform_indices = @transform_2, window_bounds = array<i64: 2, 1, 32>}, {pipeline_mode = #tpu.pipeline_mode<synchronous>, transform_indices = @transform_3, window_bounds = array<i64: 32, 96>}, {pipeline_mode = #tpu.pipeline_mode<synchronous>, transform_indices = @transform_4, window_bounds = array<i64: 1, 96>}, {pipeline_mode = #tpu.pipeline_mode<synchronous>, transform_indices = @transform_5, window_bounds = array<i64: 32, 64>}, {pipeline_mode = #tpu.pipeline_mode<synchronous>, transform_indices = @transform_6, window_bounds = array<i64: 1, 64>}, {pipeline_mode = #tpu.pipeline_mode<synchronous>, transform_indices = @transform_7, window_bounds = array<i64: 32, 32>}, {pipeline_mode = #tpu.pipeline_mode<synchronous>, transform_indices = @transform_8, window_bounds = array<i64: 1, 32>}, {pipeline_mode = #tpu.pipeline_mode<synchronous>, transform_indices = @transform_9, window_bounds = array<i64: 1, 32>}, {pipeline_mode = #tpu.pipeline_mode<synchronous>, transform_indices = @transform_10, window_bounds = array<i64: 1, 32>}, {pipeline_mode = #tpu.pipeline_mode<synchronous>, transform_indices = @transform_11, window_bounds = array<i64: 32, 4>}, {pipeline_mode = #tpu.pipeline_mode<synchronous>, transform_indices = @transform_12, window_bounds = array<i64: 4, 32>}, {transform_indices = @transform_13, window_bounds = array<i64: 2, 8, 32>}]} {
    %c0 = arith.constant 0 : index
    %c0_0 = arith.constant 0 : index
    %c0_1 = arith.constant 0 : index
    %0 = vector.load %arg1[%c0, %c0_0, %c0_1] : memref<2x10x32xf32, #tpu.memory_space<vmem>>, vector<2x10x32xf32>
    %1 = vector.shape_cast %0 : vector<2x10x32xf32> to vector<20x32xf32>
    %2 = arith.truncf %1 : vector<20x32xf32> to vector<20x32xbf16>
    %c0_2 = arith.constant 0 : index
    %c0_3 = arith.constant 0 : index
    %3 = vector.load %arg4[%c0_2, %c0_3] : memref<32x96xbf16, #tpu.memory_space<vmem>>, vector<32x96xbf16>
    %cst = arith.constant dense<0.000000e+00> : vector<20x96xf32>
    %4 = tpu.matmul %2, %3, %cst {dimension_numbers = #tpu.dot_dimension_numbers<[1], [0], [0], [1], [0, 0, 1, 1], [], []>} : vector<20x32xbf16>, vector<32x96xbf16>, vector<20x96xf32> -> vector<20x96xf32>
    %c0_4 = arith.constant 0 : index
    %c0_5 = arith.constant 0 : index
    %5 = vector.load %arg5[%c0_4, %c0_5] : memref<1x96xf32, #tpu.memory_space<vmem>>, vector<1x96xf32>
    %6 = vector.broadcast %5 : vector<1x96xf32> to vector<20x96xf32>
    %7 = arith.addf %4, %6 : vector<20x96xf32>
    %8 = vector.shape_cast %7 : vector<20x96xf32> to vector<2x10x96xf32>
    %9 = vector.extract_strided_slice %8 {offsets = [0, 1, 0], sizes = [2, 8, 32], strides = [1, 1, 1]} : vector<2x10x96xf32> to vector<2x8x32xf32>
    %10 = vector.shape_cast %9 : vector<2x8x32xf32> to vector<16x32xf32>
    %11 = vector.extract_strided_slice %8 {offsets = [0, 0, 32], sizes = [2, 8, 64], strides = [1, 1, 1]} : vector<2x10x96xf32> to vector<2x8x64xf32>
    %12 = vector.shape_cast %11 : vector<2x8x64xf32> to vector<16x64xf32>
    %13 = vector.extract_strided_slice %8 {offsets = [0, 1, 32], sizes = [2, 8, 64], strides = [1, 1, 1]} : vector<2x10x96xf32> to vector<2x8x64xf32>
    %14 = vector.shape_cast %13 : vector<2x8x64xf32> to vector<16x64xf32>
    %15 = vector.extract_strided_slice %8 {offsets = [0, 2, 32], sizes = [2, 8, 64], strides = [1, 1, 1]} : vector<2x10x96xf32> to vector<2x8x64xf32>
    %16 = vector.shape_cast %15 : vector<2x8x64xf32> to vector<16x64xf32>
    %c0_6 = arith.constant 0 : index
    %c0_7 = arith.constant 0 : index
    %c0_8 = arith.constant 0 : index
    %17 = vector.load %arg2[%c0_6, %c0_7, %c0_8] : memref<2x8x32xf32, #tpu.memory_space<vmem>>, vector<2x8x32xf32>
    %18 = vector.shape_cast %17 : vector<2x8x32xf32> to vector<16x32xf32>
    %19 = arith.truncf %18 : vector<16x32xf32> to vector<16x32xbf16>
    %c0_9 = arith.constant 0 : index
    %c0_10 = arith.constant 0 : index
    %20 = vector.load %arg6[%c0_9, %c0_10] : memref<32x64xbf16, #tpu.memory_space<vmem>>, vector<32x64xbf16>
    %cst_11 = arith.constant dense<0.000000e+00> : vector<16x64xf32>
    %21 = tpu.matmul %19, %20, %cst_11 {dimension_numbers = #tpu.dot_dimension_numbers<[1], [0], [0], [1], [0, 0, 1, 1], [], []>} : vector<16x32xbf16>, vector<32x64xbf16>, vector<16x64xf32> -> vector<16x64xf32>
    %c0_12 = arith.constant 0 : index
    %c0_13 = arith.constant 0 : index
    %22 = vector.load %arg7[%c0_12, %c0_13] : memref<1x64xf32, #tpu.memory_space<vmem>>, vector<1x64xf32>
    %23 = vector.broadcast %22 : vector<1x64xf32> to vector<16x64xf32>
    %24 = arith.addf %21, %23 : vector<16x64xf32>
    %c0_14 = arith.constant 0 : index
    %c0_15 = arith.constant 0 : index
    %c0_16 = arith.constant 0 : index
    %25 = vector.load %arg3[%c0_14, %c0_15, %c0_16] : memref<2x1x32xf32, #tpu.memory_space<vmem>>, vector<2x1x32xf32>
    %26 = vector.shape_cast %25 : vector<2x1x32xf32> to vector<2x32xf32>
    %27 = arith.truncf %26 : vector<2x32xf32> to vector<2x32xbf16>
    %c0_17 = arith.constant 0 : index
    %c0_18 = arith.constant 0 : index
    %28 = vector.load %arg6[%c0_17, %c0_18] : memref<32x64xbf16, #tpu.memory_space<vmem>>, vector<32x64xbf16>
    %cst_19 = arith.constant dense<0.000000e+00> : vector<2x64xf32>
    %29 = tpu.matmul %27, %28, %cst_19 {dimension_numbers = #tpu.dot_dimension_numbers<[1], [0], [0], [1], [0, 0, 1, 1], [], []>} : vector<2x32xbf16>, vector<32x64xbf16>, vector<2x64xf32> -> vector<2x64xf32>
    %c0_20 = arith.constant 0 : index
    %c0_21 = arith.constant 0 : index
    %30 = vector.load %arg7[%c0_20, %c0_21] : memref<1x64xf32, #tpu.memory_space<vmem>>, vector<1x64xf32>
    %31 = vector.broadcast %30 : vector<1x64xf32> to vector<2x64xf32>
    %32 = arith.addf %29, %31 : vector<2x64xf32>
    %33 = vector.shape_cast %32 : vector<2x64xf32> to vector<2x1x64xf32>
    %34 = vector.shape_cast %33 : vector<2x1x64xf32> to vector<2x1x64xf32>
    %35 = vector.broadcast %34 : vector<2x1x64xf32> to vector<2x8x64xf32>
    %36 = vector.shape_cast %35 : vector<2x8x64xf32> to vector<16x64xf32>
    %c0_22 = arith.constant 0 : index
    %c0_23 = arith.constant 0 : index
    %37 = vector.load %arg12[%c0_22, %c0_23] : memref<32x4xf32, #tpu.memory_space<vmem>>, vector<32x4xf32>
    %c0_24 = arith.constant 0 : index
    %c0_25 = arith.constant 0 : index
    %38 = vector.load %arg13[%c0_24, %c0_25] : memref<4x32xf32, #tpu.memory_space<vmem>>, vector<4x32xf32>
    %39 = vector.extract_strided_slice %12 {offsets = [0, 0], sizes = [16, 32], strides = [1, 1]} : vector<16x64xf32> to vector<16x32xf32>
    %40 = arith.mulf %10, %39 : vector<16x32xf32>
    %cst_26 = arith.constant dense<0.000000e+00> : vector<16x4xf32>
    %41 = tpu.matmul %40, %37, %cst_26 {dimension_numbers = #tpu.dot_dimension_numbers<[1], [0], [0], [1], [0, 0, 1, 1], [], []>} : vector<16x32xf32>, vector<32x4xf32>, vector<16x4xf32> -> vector<16x4xf32>
    %cst_27 = arith.constant 0.353553385 : f32
    %42 = vector.broadcast %cst_27 : f32 to vector<16x4xf32>
    %43 = arith.mulf %41, %42 : vector<16x4xf32>
    %44 = vector.extract_strided_slice %14 {offsets = [0, 0], sizes = [16, 32], strides = [1, 1]} : vector<16x64xf32> to vector<16x32xf32>
    %45 = arith.mulf %10, %44 : vector<16x32xf32>
    %cst_28 = arith.constant dense<0.000000e+00> : vector<16x4xf32>
    %46 = tpu.matmul %45, %37, %cst_28 {dimension_numbers = #tpu.dot_dimension_numbers<[1], [0], [0], [1], [0, 0, 1, 1], [], []>} : vector<16x32xf32>, vector<32x4xf32>, vector<16x4xf32> -> vector<16x4xf32>
    %cst_29 = arith.constant 0.353553385 : f32
    %47 = vector.broadcast %cst_29 : f32 to vector<16x4xf32>
    %48 = arith.mulf %46, %47 : vector<16x4xf32>
    %49 = vector.extract_strided_slice %16 {offsets = [0, 0], sizes = [16, 32], strides = [1, 1]} : vector<16x64xf32> to vector<16x32xf32>
    %50 = arith.mulf %10, %49 : vector<16x32xf32>
    %cst_30 = arith.constant dense<0.000000e+00> : vector<16x4xf32>
    %51 = tpu.matmul %50, %37, %cst_30 {dimension_numbers = #tpu.dot_dimension_numbers<[1], [0], [0], [1], [0, 0, 1, 1], [], []>} : vector<16x32xf32>, vector<32x4xf32>, vector<16x4xf32> -> vector<16x4xf32>
    %cst_31 = arith.constant 0.353553385 : f32
    %52 = vector.broadcast %cst_31 : f32 to vector<16x4xf32>
    %53 = arith.mulf %51, %52 : vector<16x4xf32>
    %54 = vector.extract_strided_slice %24 {offsets = [0, 0], sizes = [16, 32], strides = [1, 1]} : vector<16x64xf32> to vector<16x32xf32>
    %55 = arith.mulf %10, %54 : vector<16x32xf32>
    %cst_32 = arith.constant dense<0.000000e+00> : vector<16x4xf32>
    %56 = tpu.matmul %55, %37, %cst_32 {dimension_numbers = #tpu.dot_dimension_numbers<[1], [0], [0], [1], [0, 0, 1, 1], [], []>} : vector<16x32xf32>, vector<32x4xf32>, vector<16x4xf32> -> vector<16x4xf32>
    %cst_33 = arith.constant 0.353553385 : f32
    %57 = vector.broadcast %cst_33 : f32 to vector<16x4xf32>
    %58 = arith.mulf %56, %57 : vector<16x4xf32>
    %59 = vector.extract_strided_slice %36 {offsets = [0, 0], sizes = [16, 32], strides = [1, 1]} : vector<16x64xf32> to vector<16x32xf32>
    %60 = arith.mulf %10, %59 : vector<16x32xf32>
    %cst_34 = arith.constant dense<0.000000e+00> : vector<16x4xf32>
    %61 = tpu.matmul %60, %37, %cst_34 {dimension_numbers = #tpu.dot_dimension_numbers<[1], [0], [0], [1], [0, 0, 1, 1], [], []>} : vector<16x32xf32>, vector<32x4xf32>, vector<16x4xf32> -> vector<16x4xf32>
    %cst_35 = arith.constant 0.353553385 : f32
    %62 = vector.broadcast %cst_35 : f32 to vector<16x4xf32>
    %63 = arith.mulf %61, %62 : vector<16x4xf32>
    %64 = arith.maximumf %43, %48 : vector<16x4xf32>
    %65 = arith.maximumf %64, %53 : vector<16x4xf32>
    %66 = arith.maximumf %65, %58 : vector<16x4xf32>
    %67 = arith.maximumf %66, %63 : vector<16x4xf32>
    %68 = arith.subf %43, %67 : vector<16x4xf32>
    %69 = math.exp %68 : vector<16x4xf32>
    %70 = arith.subf %48, %67 : vector<16x4xf32>
    %71 = math.exp %70 : vector<16x4xf32>
    %72 = arith.subf %53, %67 : vector<16x4xf32>
    %73 = math.exp %72 : vector<16x4xf32>
    %74 = arith.subf %58, %67 : vector<16x4xf32>
    %75 = math.exp %74 : vector<16x4xf32>
    %76 = arith.subf %63, %67 : vector<16x4xf32>
    %77 = math.exp %76 : vector<16x4xf32>
    %78 = arith.addf %69, %71 : vector<16x4xf32>
    %79 = arith.addf %78, %73 : vector<16x4xf32>
    %80 = arith.addf %79, %75 : vector<16x4xf32>
    %81 = arith.addf %80, %77 : vector<16x4xf32>
    %82 = tpu.reciprocal %81 {approx = true} : vector<16x4xf32> -> vector<16x4xf32>
    %cst_36 = arith.constant 0.000000e+00 : f32
    %83 = vector.broadcast %cst_36 : f32 to vector<16x32xf32>
    %84 = arith.mulf %69, %82 : vector<16x4xf32>
    %cst_37 = arith.constant dense<0.000000e+00> : vector<16x32xf32>
    %85 = tpu.matmul %84, %38, %cst_37 {dimension_numbers = #tpu.dot_dimension_numbers<[1], [0], [0], [1], [0, 0, 1, 1], [], []>} : vector<16x4xf32>, vector<4x32xf32>, vector<16x32xf32> -> vector<16x32xf32>
    %86 = vector.extract_strided_slice %12 {offsets = [0, 32], sizes = [16, 32], strides = [1, 1]} : vector<16x64xf32> to vector<16x32xf32>
    %87 = arith.mulf %85, %86 : vector<16x32xf32>
    %88 = arith.addf %83, %87 : vector<16x32xf32>
    %89 = arith.mulf %71, %82 : vector<16x4xf32>
    %cst_38 = arith.constant dense<0.000000e+00> : vector<16x32xf32>
    %90 = tpu.matmul %89, %38, %cst_38 {dimension_numbers = #tpu.dot_dimension_numbers<[1], [0], [0], [1], [0, 0, 1, 1], [], []>} : vector<16x4xf32>, vector<4x32xf32>, vector<16x32xf32> -> vector<16x32xf32>
    %91 = vector.extract_strided_slice %14 {offsets = [0, 32], sizes = [16, 32], strides = [1, 1]} : vector<16x64xf32> to vector<16x32xf32>
    %92 = arith.mulf %90, %91 : vector<16x32xf32>
    %93 = arith.addf %88, %92 : vector<16x32xf32>
    %94 = arith.mulf %73, %82 : vector<16x4xf32>
    %cst_39 = arith.constant dense<0.000000e+00> : vector<16x32xf32>
    %95 = tpu.matmul %94, %38, %cst_39 {dimension_numbers = #tpu.dot_dimension_numbers<[1], [0], [0], [1], [0, 0, 1, 1], [], []>} : vector<16x4xf32>, vector<4x32xf32>, vector<16x32xf32> -> vector<16x32xf32>
    %96 = vector.extract_strided_slice %16 {offsets = [0, 32], sizes = [16, 32], strides = [1, 1]} : vector<16x64xf32> to vector<16x32xf32>
    %97 = arith.mulf %95, %96 : vector<16x32xf32>
    %98 = arith.addf %93, %97 : vector<16x32xf32>
    %99 = arith.mulf %75, %82 : vector<16x4xf32>
    %cst_40 = arith.constant dense<0.000000e+00> : vector<16x32xf32>
    %100 = tpu.matmul %99, %38, %cst_40 {dimension_numbers = #tpu.dot_dimension_numbers<[1], [0], [0], [1], [0, 0, 1, 1], [], []>} : vector<16x4xf32>, vector<4x32xf32>, vector<16x32xf32> -> vector<16x32xf32>
    %101 = vector.extract_strided_slice %24 {offsets = [0, 32], sizes = [16, 32], strides = [1, 1]} : vector<16x64xf32> to vector<16x32xf32>
    %102 = arith.mulf %100, %101 : vector<16x32xf32>
    %103 = arith.addf %98, %102 : vector<16x32xf32>
    %104 = arith.mulf %77, %82 : vector<16x4xf32>
    %cst_41 = arith.constant dense<0.000000e+00> : vector<16x32xf32>
    %105 = tpu.matmul %104, %38, %cst_41 {dimension_numbers = #tpu.dot_dimension_numbers<[1], [0], [0], [1], [0, 0, 1, 1], [], []>} : vector<16x4xf32>, vector<4x32xf32>, vector<16x32xf32> -> vector<16x32xf32>
    %106 = vector.extract_strided_slice %36 {offsets = [0, 32], sizes = [16, 32], strides = [1, 1]} : vector<16x64xf32> to vector<16x32xf32>
    %107 = arith.mulf %105, %106 : vector<16x32xf32>
    %108 = arith.addf %103, %107 : vector<16x32xf32>
    %109 = arith.truncf %108 : vector<16x32xf32> to vector<16x32xbf16>
    %c0_42 = arith.constant 0 : index
    %c0_43 = arith.constant 0 : index
    %110 = vector.load %arg8[%c0_42, %c0_43] : memref<32x32xbf16, #tpu.memory_space<vmem>>, vector<32x32xbf16>
    %cst_44 = arith.constant dense<0.000000e+00> : vector<16x32xf32>
    %111 = tpu.matmul %109, %110, %cst_44 {dimension_numbers = #tpu.dot_dimension_numbers<[1], [0], [0], [1], [0, 0, 1, 1], [], []>} : vector<16x32xbf16>, vector<32x32xbf16>, vector<16x32xf32> -> vector<16x32xf32>
    %c0_45 = arith.constant 0 : index
    %c0_46 = arith.constant 0 : index
    %112 = vector.load %arg9[%c0_45, %c0_46] : memref<1x32xf32, #tpu.memory_space<vmem>>, vector<1x32xf32>
    %113 = vector.broadcast %112 : vector<1x32xf32> to vector<16x32xf32>
    %114 = arith.addf %111, %113 : vector<16x32xf32>
    %cst_47 = arith.constant 0.000000e+00 : f32
    %115 = vector.broadcast %cst_47 : f32 to vector<16x32xf32>
    %116 = arith.maximumf %114, %115 : vector<16x32xf32>
    %cst_48 = arith.constant dense<0.000000e+00> : vector<16xf32>
    %117 = vector.multi_reduction <add>, %116, %cst_48 [1] : vector<16x32xf32> to vector<16xf32>
    %118 = vector.shape_cast %117 : vector<16xf32> to vector<16x1xf32>
    %cst_49 = arith.constant 3.200000e+01 : f32
    %119 = vector.broadcast %cst_49 : f32 to vector<16x1xf32>
    %120 = arith.divf %118, %119 : vector<16x1xf32>
    %121 = vector.broadcast %120 : vector<16x1xf32> to vector<16x32xf32>
    %122 = arith.subf %116, %121 : vector<16x32xf32>
    %123 = arith.mulf %122, %122 : vector<16x32xf32>
    %cst_50 = arith.constant dense<0.000000e+00> : vector<16xf32>
    %124 = vector.multi_reduction <add>, %123, %cst_50 [1] : vector<16x32xf32> to vector<16xf32>
    %125 = vector.shape_cast %124 : vector<16xf32> to vector<16x1xf32>
    %cst_51 = arith.constant 3.200000e+01 : f32
    %126 = vector.broadcast %cst_51 : f32 to vector<16x1xf32>
    %127 = arith.divf %125, %126 : vector<16x1xf32>
    %128 = vector.broadcast %120 : vector<16x1xf32> to vector<16x32xf32>
    %129 = arith.subf %116, %128 : vector<16x32xf32>
    %cst_52 = arith.constant 9.99999974E-6 : f32
    %130 = vector.broadcast %cst_52 : f32 to vector<16x1xf32>
    %131 = arith.addf %127, %130 : vector<16x1xf32>
    %132 = math.rsqrt %131 : vector<16x1xf32>
    %133 = vector.broadcast %132 : vector<16x1xf32> to vector<16x32xf32>
    %134 = arith.mulf %129, %133 : vector<16x32xf32>
    %c0_53 = arith.constant 0 : index
    %c0_54 = arith.constant 0 : index
    %135 = vector.load %arg10[%c0_53, %c0_54] : memref<1x32xf32, #tpu.memory_space<vmem>>, vector<1x32xf32>
    %136 = vector.broadcast %135 : vector<1x32xf32> to vector<16x32xf32>
    %137 = arith.mulf %134, %136 : vector<16x32xf32>
    %c0_55 = arith.constant 0 : index
    %c0_56 = arith.constant 0 : index
    %138 = vector.load %arg11[%c0_55, %c0_56] : memref<1x32xf32, #tpu.memory_space<vmem>>, vector<1x32xf32>
    %139 = vector.broadcast %138 : vector<1x32xf32> to vector<16x32xf32>
    %140 = arith.addf %137, %139 : vector<16x32xf32>
    %141 = vector.shape_cast %140 : vector<16x32xf32> to vector<2x8x32xf32>
    %c0_57 = arith.constant 0 : index
    %c0_58 = arith.constant 0 : index
    %c0_59 = arith.constant 0 : index
    %142 = vector.load %arg14[%c0_57, %c0_58, %c0_59] : memref<2x8x32xf32, #tpu.memory_space<vmem>>, vector<2x8x32xf32>
    tpu.vector_store %arg14[%c0_57, %c0_58, %c0_59], %141 {strides = array<i32>} : memref<2x8x32xf32, #tpu.memory_space<vmem>>, vector<2x8x32xf32>,
    return
  }
  func.func @transform_0(%arg0: i32) -> (i32, i32, i32) {
    %c0_i32 = arith.constant 0 : i32
    %c0_i32_0 = arith.constant 0 : i32
    %c0_i32_1 = arith.constant 0 : i32
    return %arg0, %c0_i32, %c0_i32_0 : i32, i32, i32
  }
  func.func @transform_1(%arg0: i32) -> (i32, i32, i32) {
    %c0_i32 = arith.constant 0 : i32
    %c0_i32_0 = arith.constant 0 : i32
    %c0_i32_1 = arith.constant 0 : i32
    return %arg0, %c0_i32, %c0_i32_0 : i32, i32, i32
  }
  func.func @transform_2(%arg0: i32) -> (i32, i32, i32) {
    %c0_i32 = arith.constant 0 : i32
    %c0_i32_0 = arith.constant 0 : i32
    %c0_i32_1 = arith.constant 0 : i32
    return %arg0, %c0_i32, %c0_i32_0 : i32, i32, i32
  }
  func.func @transform_3(%arg0: i32) -> (i32, i32) {
    %c0_i32 = arith.constant 0 : i32
    %c0_i32_0 = arith.constant 0 : i32
    %c0_i32_1 = arith.constant 0 : i32
    return %c0_i32, %c0_i32_0 : i32, i32
  }
  func.func @transform_4(%arg0: i32) -> (i32, i32) {
    %c0_i32 = arith.constant 0 : i32
    %c0_i32_0 = arith.constant 0 : i32
    %c0_i32_1 = arith.constant 0 : i32
    return %c0_i32, %c0_i32_0 : i32, i32
  }
  func.func @transform_5(%arg0: i32) -> (i32, i32) {
    %c0_i32 = arith.constant 0 : i32
    %c0_i32_0 = arith.constant 0 : i32
    %c0_i32_1 = arith.constant 0 : i32
    return %c0_i32, %c0_i32_0 : i32, i32
  }
  func.func @transform_6(%arg0: i32) -> (i32, i32) {
    %c0_i32 = arith.constant 0 : i32
    %c0_i32_0 = arith.constant 0 : i32
    %c0_i32_1 = arith.constant 0 : i32
    return %c0_i32, %c0_i32_0 : i32, i32
  }
  func.func @transform_7(%arg0: i32) -> (i32, i32) {
    %c0_i32 = arith.constant 0 : i32
    %c0_i32_0 = arith.constant 0 : i32
    %c0_i32_1 = arith.constant 0 : i32
    return %c0_i32, %c0_i32_0 : i32, i32
  }
  func.func @transform_8(%arg0: i32) -> (i32, i32) {
    %c0_i32 = arith.constant 0 : i32
    %c0_i32_0 = arith.constant 0 : i32
    %c0_i32_1 = arith.constant 0 : i32
    return %c0_i32, %c0_i32_0 : i32, i32
  }
  func.func @transform_9(%arg0: i32) -> (i32, i32) {
    %c0_i32 = arith.constant 0 : i32
    %c0_i32_0 = arith.constant 0 : i32
    %c0_i32_1 = arith.constant 0 : i32
    return %c0_i32, %c0_i32_0 : i32, i32
  }
  func.func @transform_10(%arg0: i32) -> (i32, i32) {
    %c0_i32 = arith.constant 0 : i32
    %c0_i32_0 = arith.constant 0 : i32
    %c0_i32_1 = arith.constant 0 : i32
    return %c0_i32, %c0_i32_0 : i32, i32
  }
  func.func @transform_11(%arg0: i32) -> (i32, i32) {
    %c0_i32 = arith.constant 0 : i32
    %c0_i32_0 = arith.constant 0 : i32
    %c0_i32_1 = arith.constant 0 : i32
    return %c0_i32, %c0_i32_0 : i32, i32
  }
  func.func @transform_12(%arg0: i32) -> (i32, i32) {
    %c0_i32 = arith.constant 0 : i32
    %c0_i32_0 = arith.constant 0 : i32
    %c0_i32_1 = arith.constant 0 : i32
    return %c0_i32, %c0_i32_0 : i32, i32
  }
  func.func @transform_13(%arg0: i32) -> (i32, i32, i32) {
    %c0_i32 = arith.constant 0 : i32
    %c0_i32_0 = arith.constant 0 : i32
    %c0_i32_1 = arith.constant 0 : i32
    return %arg0, %c0_i32, %c0_i32_0 : i32, i32, i32
  }
}

</mosaic_0001>

<llo_original>
// kernel: tpu_custom_call.1
$region0: #{tpu_custom_call.1}
  #allocation0 [shape = 'u32[]', space=smem, size = 0x4, offset = 0x4, fixed_abs, tag = 'smem constant byte address 0x4 - core index']
  #allocation1 [shape = 'u32[72,128]{1,0:T(1,128)}', space=vmem, size = 0x9000, scoped, tag = 'internal scratch']
  %s0 = inlined_call_operand.vmem [shape: f32[2,10,32], index: 0, kind: input, shape index: {}]
  %s1 = inlined_call_operand.vmem [shape: f32[2,8,32], index: 1, kind: input, shape index: {}]
  %s2 = inlined_call_operand.vmem [shape: f32[2,1,32], index: 2, kind: input, shape index: {}]
  %s3 = inlined_call_operand.vmem [shape: bf16[32,96], index: 3, kind: input, shape index: {}]
  %s4 = inlined_call_operand.vmem [shape: f32[1,96], index: 4, kind: input, shape index: {}]
  %s5 = inlined_call_operand.vmem [shape: bf16[32,64], index: 5, kind: input, shape index: {}]
  %s6 = inlined_call_operand.vmem [shape: f32[1,64], index: 6, kind: input, shape index: {}]
  %s7 = inlined_call_operand.vmem [shape: bf16[32,32], index: 7, kind: input, shape index: {}]
  %s8 = inlined_call_operand.vmem [shape: f32[1,32], index: 8, kind: input, shape index: {}]
  %s9 = inlined_call_operand.vmem [shape: f32[1,32], index: 9, kind: input, shape index: {}]
  %s10 = inlined_call_operand.vmem [shape: f32[1,32], index: 10, kind: input, shape index: {}]
  %s11 = inlined_call_operand.vmem [shape: f32[32,4], index: 11, kind: input, shape index: {}]
  %s12 = inlined_call_operand.vmem [shape: f32[4,32], index: 12, kind: input, shape index: {}]
  %s13 = inlined_call_operand.hbm [shape: f32[2,8,32], index: 13, kind: output, shape index: {}]
  %s14 = sld [smem:[#allocation0]]
  $region62: #{tpu_custom_call.1} parent=0
    _
  %s16 = ssub.s32 1, %s14
  %s17 = scalar_select 0, %s16, %s14
  $region1: #{tpu_custom_call.1} parent=0
    #allocation2 [shape = 'u8[8192]{0}', space=vmem, size = 0x2000, scoped, tag = 'output window, operand 0, single buffered']
    #allocation3 [shape = 's32[1]{0}', space=sflag, size = 0x4, scoped, tag = 'scoped memory for tpu_custom_call.1']
    %18 = vsyncpa [#allocation3], 0
    // Predicated region
    $region2: #{tpu_custom_call.1} parent=1 // pred_check
      _
    $region3: #{tpu_custom_call.1} parent=1 // pred_check_branch
      %20 = sbr.rel (0) target = $region5
    $region4: #{tpu_custom_call.1} parent=1 // pred_region
      _
    $region5: #{tpu_custom_call.1} parent=1 // pred_fallthru
      _
    // Predicated region
    $region6: #{tpu_custom_call.1} parent=1 // pred_check
      _
    $region7: #{tpu_custom_call.1} parent=1 // pred_check_branch
      %22 = sbr.rel (0) target = $region9
    $region8: #{tpu_custom_call.1} parent=1 // pred_region
      _
    $region9: #{tpu_custom_call.1} parent=1 // pred_fallthru
      _
    // Predicated region
    $region10: #{tpu_custom_call.1} parent=1 // pred_check
      _
    $region11: #{tpu_custom_call.1} parent=1 // pred_check_branch
      %24 = sbr.rel (0) target = $region13
    $region12: #{tpu_custom_call.1} parent=1 // pred_region
      _
    $region13: #{tpu_custom_call.1} parent=1 // pred_fallthru
      _
    // Predicated region
    $region14: #{tpu_custom_call.1} parent=1 // pred_check
      _
    $region15: #{tpu_custom_call.1} parent=1 // pred_check_branch
      %26 = sbr.rel (0) target = $region17
    $region16: #{tpu_custom_call.1} parent=1 // pred_region
      _
    $region17: #{tpu_custom_call.1} parent=1 // pred_fallthru
      _
    // Predicated region
    $region18: #{tpu_custom_call.1} parent=1 // pred_check
      _
    $region19: #{tpu_custom_call.1} parent=1 // pred_check_branch
      %28 = sbr.rel (0) target = $region21
    $region20: #{tpu_custom_call.1} parent=1 // pred_region
      _
    $region21: #{tpu_custom_call.1} parent=1 // pred_fallthru
      _
    // Predicated region
    $region22: #{tpu_custom_call.1} parent=1 // pred_check
      _
    $region23: #{tpu_custom_call.1} parent=1 // pred_check_branch
      %30 = sbr.rel (0) target = $region25
    $region24: #{tpu_custom_call.1} parent=1 // pred_region
      _
    $region25: #{tpu_custom_call.1} parent=1 // pred_fallthru
      _
    // Predicated region
    $region26: #{tpu_custom_call.1} parent=1 // pred_check
      _
    $region27: #{tpu_custom_call.1} parent=1 // pred_check_branch
      %32 = sbr.rel (0) target = $region29
    $region28: #{tpu_custom_call.1} parent=1 // pred_region
      _
    $region29: #{tpu_custom_call.1} parent=1 // pred_fallthru
      _
    // Predicated region
    $region30: #{tpu_custom_call.1} parent=1 // pred_check
      _
    $region31: #{tpu_custom_call.1} parent=1 // pred_check_branch
      %34 = sbr.rel (0) target = $region33
    $region32: #{tpu_custom_call.1} parent=1 // pred_region
      _
    $region33: #{tpu_custom_call.1} parent=1 // pred_fallthru
      _
    // Predicated region
    $region34: #{tpu_custom_call.1} parent=1 // pred_check
      _
    $region35: #{tpu_custom_call.1} parent=1 // pred_check_branch
      %36 = sbr.rel (0) target = $region37
    $region36: #{tpu_custom_call.1} parent=1 // pred_region
      _
    $region37: #{tpu_custom_call.1} parent=1 // pred_fallthru
      _
    // Predicated region
    $region38: #{tpu_custom_call.1} parent=1 // pred_check
      _
    $region39: #{tpu_custom_call.1} parent=1 // pred_check_branch
      %38 = sbr.rel (0) target = $region41
    $region40: #{tpu_custom_call.1} parent=1 // pred_region
      _
    $region41: #{tpu_custom_call.1} parent=1 // pred_fallthru
      _
    // Predicated region
    $region42: #{tpu_custom_call.1} parent=1 // pred_check
      _
    $region43: #{tpu_custom_call.1} parent=1 // pred_check_branch
      %40 = sbr.rel (0) target = $region45
    $region44: #{tpu_custom_call.1} parent=1 // pred_region
      _
    $region45: #{tpu_custom_call.1} parent=1 // pred_fallthru
      _
    // Predicated region
    $region46: #{tpu_custom_call.1} parent=1 // pred_check
      _
    $region47: #{tpu_custom_call.1} parent=1 // pred_check_branch
      %42 = sbr.rel (0) target = $region49
    $region48: #{tpu_custom_call.1} parent=1 // pred_region
      _
    $region49: #{tpu_custom_call.1} parent=1 // pred_fallthru
      _
    // Predicated region
    $region50: #{tpu_custom_call.1} parent=1 // pred_check
      _
    $region51: #{tpu_custom_call.1} parent=1 // pred_check_branch
      %44 = sbr.rel (0) target = $region53
    $region52: #{tpu_custom_call.1} parent=1 // pred_region
      _
    $region53: #{tpu_custom_call.1} parent=1 // pred_fallthru
      _
    %v46 = vld [vmem:[%s0] sm:$0xff]
    %v47 = vld [vmem:[%s0 + $0x8] sm:$0x3]
    %v48 = vld [vmem:[%s0 + $0x10] sm:$0xff]
    %v49 = vld [vmem:[%s0 + $0x18] sm:$0x3]
    %v54 = vrot.slane %v46, 2
    %v55 = vrot.slane %v46, 4
    %v56 = vrot.slane %v46, 6
    %v57 = vrot.slane %v48, 2
    %v58 = vrot.slane %v48, 4
    %v59 = vrot.slane %v48, 6
    %60 = vst [vmem:[#allocation1] ss:$4 sm:$0xff] %v46
    %s61 = scalar_lea.vmem [#allocation1], 1
    %62 = vst [vmem:[%s61] ss:$4 sm:$0xff] %v54
    %s63 = scalar_lea.vmem [#allocation1], 2
    %64 = vst [vmem:[%s63] ss:$4 sm:$0xff] %v55
    %s65 = scalar_lea.vmem [#allocation1], 3
    %66 = vst [vmem:[%s65] ss:$4 sm:$0xff] %v56
    %s67 = scalar_lea.vmem [#allocation1], 32
    %68 = vst [vmem:[%s67] ss:$4 sm:$0xff] %v47
    %s69 = scalar_lea.vmem [#allocation1], 33
    %70 = vst [vmem:[%s69] ss:$4 sm:$0xff] %v48
    %s71 = scalar_lea.vmem [#allocation1], 34
    %72 = vst [vmem:[%s71] ss:$4 sm:$0xff] %v57
    %s73 = scalar_lea.vmem [#allocation1], 35
    %74 = vst [vmem:[%s73] ss:$4 sm:$0xff] %v58
    %v75 = vld.sshfl [vmem:[#allocation1] sm:$0xff pattern:$0x73625140]
    %v76 = vld.sshfl [vmem:[#allocation1 + $0x20] sm:$0xff pattern:$0x73625140]
    %77 = vst [vmem:[#allocation1] ss:$4 sm:$0xff] %v59
    %78 = vst [vmem:[%s61] ss:$4 sm:$0xff] %v49
    %v79 = vld.sshfl [vmem:[#allocation1] sm:$0xff pattern:$0x73625140]
    %v83 = vpack.c.bf16 %v76, %v75
    %v84 = vpack.c.bf16 %v79, %v79
    %v85 = vld [vmem:[%s3] sm:$0xf]
    %v86 = vld [vmem:[%s3 + $0x4] sm:$0xf]
    %v87 = vld [vmem:[%s3 + $0x8] sm:$0xf]
    %v88 = vld [vmem:[%s3 + $0xc] sm:$0xf]
    %v89 = vld [vmem:[%s4] sm:$0x1]
    %v91 = vperm.slane %v89, 0
    %v97 = vunpack.c.l.b16 %v85
    %v98 = vunpack.c.l.b16 %v86
    %v99 = vunpack.c.l.b16 %v87
    %v100 = vunpack.c.l.b16 %v88
    %v101 = vpack.c.b16 %v98, %v97
    %v102 = vpack.c.b16 %v100, %v99
    %vm105 = vcmask 261120
    %v107 = vsel %vm105, %v83, 0
    %v110 = vsel %vm105, %v84, 0
    %112 = vmatpush.bf16.msra.mxu0 0
    %113 = vmatpush.bf16.msra.mxu0 0
    %114 = vmatpush.bf16.msra.mxu0 0
    %115 = vmatpush.bf16.msra.mxu0 0
    %116 = vmatpush.bf16.msra.mxu0 0
    %117 = vmatpush.bf16.msra.mxu0 0
    %118 = vmatpush.bf16.msra.mxu0 %v102
    %119 = vmatpush.bf16.msra.mxu0 %v101
    %120 = vmatmul.bf16.gmra.mxu0 %v107
    %v121 = vpop.f32.mrf.mxu0
    %v122 = vadd.f32 %v91, %v121
    %v123 = vpop.f32.mrf.mxu0
    %v124 = vadd.f32 %v91, %v123
    %125 = vmatmul.bf16.gmra.mxu0 %v110
    %v126 = vpop.f32.mrf.mxu0
    %v127 = vadd.f32 %v91, %v126
    %v128 = vpop.f32.mrf.mxu0
    %129 = vdwg.mxu0
    %v133 = vrot.slane %v122, 2
    %v134 = vrot.slane %v122, 4
    %v135 = vrot.slane %v122, 6
    %v136 = vrot.slane %v124, 2
    %v137 = vrot.slane %v124, 4
    %v138 = vrot.slane %v124, 6
    %v139 = vrot.slane %v127, 2
    %vm140 = vcmask 1040384
    %vm141 = vcmask 1042434
    %vm142 = vmor %vm140, %vm141
    %vm143 = vcmask 1044484
    %vm144 = vmor %vm142, %vm143
    %vm145 = vcmask 1046534
    %vm146 = vmor %vm144, %vm145
    %v147 = vrot.slane %v122, 7
    %v148 = vrot.slane %v147, 2
    %v149 = vrot.slane %v133, 7
    %v150 = vsel %vm146, %v148, %v149
    %v151 = vrot.slane %v149, 2
    %v152 = vrot.slane %v134, 7
    %v153 = vsel %vm146, %v151, %v152
    %v154 = vrot.slane %v152, 2
    %v155 = vrot.slane %v135, 7
    %v156 = vsel %vm146, %v154, %v155
    %v157 = vrot.slane %v155, 2
    %v158 = vrot.slane %v124, 7
    %v159 = vsel %vm146, %v157, %v158
    %v160 = vrot.slane %v136, 7
    %v161 = vrot.slane %v160, 2
    %v162 = vrot.slane %v137, 7
    %v163 = vsel %vm146, %v161, %v162
    %v164 = vrot.slane %v162, 2
    %v165 = vrot.slane %v138, 7
    %v166 = vsel %vm146, %v164, %v165
    %v167 = vrot.slane %v165, 2
    %v168 = vrot.slane %v127, 7
    %v169 = vsel %vm146, %v167, %v168
    %v170 = vrot.slane %v168, 2
    %v171 = vrot.slane %v139, 7
    %v172 = vsel %vm146, %v170, %v171
    %v181 = vld [vmem:[%s1] sm:$0xff]
    %v182 = vld [vmem:[%s1 + $0x8] sm:$0xff]
    %v183 = vpack.c.bf16 %v182, %v181
    %v184 = vld [vmem:[%s5] sm:$0xf]
    %v185 = vld [vmem:[%s5 + $0x4] sm:$0xf]
    %v186 = vld [vmem:[%s5 + $0x8] sm:$0xf]
    %v187 = vld [vmem:[%s5 + $0xc] sm:$0xf]
    %v188 = vld [vmem:[%s6] sm:$0x1]
    %v190 = vperm.slane %v188, 0
    %v196 = vunpack.c.l.b16 %v184
    %v197 = vunpack.c.l.b16 %v185
    %v198 = vunpack.c.l.b16 %v186
    %v199 = vunpack.c.l.b16 %v187
    %v200 = vpack.c.b16 %v197, %v196
    %v201 = vpack.c.b16 %v199, %v198
    %v205 = vsel %vm105, %v183, 0
    %207 = vmatpush.bf16.msra.mxu0 0
    %208 = vmatpush.bf16.msra.mxu0 0
    %209 = vmatpush.bf16.msra.mxu0 0
    %210 = vmatpush.bf16.msra.mxu0 0
    %211 = vmatpush.bf16.msra.mxu0 0
    %212 = vmatpush.bf16.msra.mxu0 0
    %213 = vmatpush.bf16.msra.mxu0 %v201
    %214 = vmatpush.bf16.msra.mxu0 %v200
    %215 = vmatmul.bf16.gmra.mxu0 %v205
    %v216 = vpop.f32.mrf.mxu0
    %v217 = vadd.f32 %v190, %v216
    %v218 = vpop.f32.mrf.mxu0
    %v219 = vadd.f32 %v190, %v218
    %220 = vdwg.mxu0
    %v221 = vld [vmem:[%s2] sm:$0x1]
    %v222 = vld [vmem:[%s2 + $0x1] sm:$0x1]
    %v223 = vpack.c.bf16 %v221, %v221
    %v224 = vpack.c.bf16 %v222, %v222
    %v227 = vunpack.c.l.b16 %v223
    %v228 = vunpack.c.l.b16 %v224
    %v229 = vrot.slane %v228, 7
    %vm230 = vcmask 1041409
    %v231 = vsel %vm230, %v229, %v227
    %v232 = vpack.c.b16 %v231, %v231
    %v234 = vsel %vm105, %v232, 0
    %236 = vmatpush.bf16.msra.mxu0 0
    %237 = vmatpush.bf16.msra.mxu0 0
    %238 = vmatpush.bf16.msra.mxu0 0
    %239 = vmatpush.bf16.msra.mxu0 0
    %240 = vmatpush.bf16.msra.mxu0 0
    %241 = vmatpush.bf16.msra.mxu0 0
    %242 = vmatpush.bf16.msra.mxu0 %v201
    %243 = vmatpush.bf16.msra.mxu0 %v200
    %244 = vmatmul.bf16.gmra.mxu0 %v234
    %v245 = vpop.f32.mrf.mxu0
    %v246 = vadd.f32 %v190, %v245
    %v247 = vpop.f32.mrf.mxu0
    %248 = vdwg.mxu0
    %v250 = vrot.slane %v246, 1
    %v251 = vperm.slane %v246, 0
    %v252 = vperm.slane %v250, 0
    %v255 = vld [vmem:[%s11] sm:$0xff]
    %v256 = vld [vmem:[%s11 + $0x8] sm:$0xff]
    %v257 = vld [vmem:[%s11 + $0x10] sm:$0xff]
    %v258 = vld [vmem:[%s11 + $0x18] sm:$0xff]
    %v259 = vld [vmem:[%s12] sm:$0xf]
    %260 = vrot.lane.b32.xlu0 %v122, 96
    %v261 = vpop.permute.xlu0 %260
    %262 = vrot.lane.b32.xlu0 %v133, 96
    %v263 = vpop.permute.xlu0 %262
    %264 = vrot.lane.b32.xlu0 %v134, 96
    %v265 = vpop.permute.xlu0 %264
    %266 = vrot.lane.b32.xlu0 %v135, 96
    %v267 = vpop.permute.xlu0 %266
    %268 = vrot.lane.b32.xlu0 %v136, 96
    %v269 = vpop.permute.xlu0 %268
    %270 = vrot.lane.b32.xlu0 %v137, 96
    %v271 = vpop.permute.xlu0 %270
    %272 = vrot.lane.b32.xlu0 %v138, 96
    %v273 = vpop.permute.xlu0 %272
    %274 = vrot.lane.b32.xlu0 %v127, 96
    %v275 = vpop.permute.xlu0 %274
    %v284 = vmul.f32 %v150, %v261
    %v285 = vmul.f32 %v153, %v263
    %v286 = vmul.f32 %v156, %v265
    %v287 = vmul.f32 %v159, %v267
    %v288 = vmul.f32 %v163, %v269
    %v289 = vmul.f32 %v166, %v271
    %v290 = vmul.f32 %v169, %v273
    %v291 = vmul.f32 %v172, %v275
    %300 = vst [vmem:[#allocation1] ss:$4 sm:$0xff] %v284
    %s301 = scalar_lea.vmem [#allocation1], 1
    %302 = vst [vmem:[%s301] ss:$4 sm:$0xff] %v285
    %s303 = scalar_lea.vmem [#allocation1], 2
    %304 = vst [vmem:[%s303] ss:$4 sm:$0xff] %v286
    %s305 = scalar_lea.vmem [#allocation1], 3
    %306 = vst [vmem:[%s305] ss:$4 sm:$0xff] %v287
    %s307 = scalar_lea.vmem [#allocation1], 32
    %308 = vst [vmem:[%s307] ss:$4 sm:$0xff] %v288
    %s309 = scalar_lea.vmem [#allocation1], 33
    %310 = vst [vmem:[%s309] ss:$4 sm:$0xff] %v289
    %s311 = scalar_lea.vmem [#allocation1], 34
    %312 = vst [vmem:[%s311] ss:$4 sm:$0xff] %v290
    %s313 = scalar_lea.vmem [#allocation1], 35
    %314 = vst [vmem:[%s313] ss:$4 sm:$0xff] %v291
    %v315 = vld.sshfl [vmem:[#allocation1] sm:$0xff pattern:$0x73625140]
    %v316 = vld.sshfl [vmem:[#allocation1 + $0x20] sm:$0xff pattern:$0x73625140]
    %v317 = vsel %vm105, %v315, 0
    %v319 = vsel %vm105, %v316, 0
    %321 = vmatpush.msra.mxu0 0.0
    %322 = vmatpush.msra.mxu0 0.0
    %323 = vmatpush.msra.mxu0 0.0
    %324 = vmatpush.msra.mxu0 0.0
    %325 = vmatpush.msra.mxu0 0.0
    %326 = vmatpush.msra.mxu0 0.0
    %327 = vmatpush.msra.mxu0 0.0
    %328 = vmatpush.msra.mxu0 0.0
    %329 = vmatpush.msra.mxu0 0.0
    %330 = vmatpush.msra.mxu0 0.0
    %331 = vmatpush.msra.mxu0 0.0
    %332 = vmatpush.msra.mxu0 0.0
    %333 = vmatpush.msra.mxu0 %v258
    %334 = vmatpush.msra.mxu0 %v257
    %335 = vmatpush.msra.mxu0 %v256
    %336 = vmatpush.msra.mxu0 %v255
    %337 = vmatmul.f32.gmra.mxu0 %v317
    %v338 = vpop.f32.mrf.mxu0
    %v339 = vadd.f32 0.0, %v338
    %340 = vmatmul.f32.gmra.mxu0 %v319
    %v341 = vpop.f32.mrf.mxu0
    %v342 = vadd.f32 0.0, %v341
    %343 = vdwg.mxu0
    %v344 = vmul.f32 %v339, 0.35355338
    %v345 = vmul.f32 %v342, 0.35355338
    %346 = vrot.lane.b32.xlu0 %v150, 96
    %v347 = vpop.permute.xlu0 %346
    %348 = vrot.lane.b32.xlu0 %v153, 96
    %v349 = vpop.permute.xlu0 %348
    %350 = vrot.lane.b32.xlu0 %v156, 96
    %v351 = vpop.permute.xlu0 %350
    %352 = vrot.lane.b32.xlu0 %v159, 96
    %v353 = vpop.permute.xlu0 %352
    %354 = vrot.lane.b32.xlu0 %v163, 96
    %v355 = vpop.permute.xlu0 %354
    %356 = vrot.lane.b32.xlu0 %v166, 96
    %v357 = vpop.permute.xlu0 %356
    %358 = vrot.lane.b32.xlu0 %v169, 96
    %v359 = vpop.permute.xlu0 %358
    %360 = vrot.lane.b32.xlu0 %v172, 96
    %v361 = vpop.permute.xlu0 %360
    %v370 = vmul.f32 %v150, %v347
    %v371 = vmul.f32 %v153, %v349
    %v372 = vmul.f32 %v156, %v351
    %v373 = vmul.f32 %v159, %v353
    %v374 = vmul.f32 %v163, %v355
    %v375 = vmul.f32 %v166, %v357
    %v376 = vmul.f32 %v169, %v359
    %v377 = vmul.f32 %v172, %v361
    %386 = vst [vmem:[#allocation1] ss:$4 sm:$0xff] %v370
    %s387 = scalar_lea.vmem [#allocation1], 1
    %388 = vst [vmem:[%s387] ss:$4 sm:$0xff] %v371
    %s389 = scalar_lea.vmem [#allocation1], 2
    %390 = vst [vmem:[%s389] ss:$4 sm:$0xff] %v372
    %s391 = scalar_lea.vmem [#allocation1], 3
    %392 = vst [vmem:[%s391] ss:$4 sm:$0xff] %v373
    %s393 = scalar_lea.vmem [#allocation1], 32
    %394 = vst [vmem:[%s393] ss:$4 sm:$0xff] %v374
    %s395 = scalar_lea.vmem [#allocation1], 33
    %396 = vst [vmem:[%s395] ss:$4 sm:$0xff] %v375
    %s397 = scalar_lea.vmem [#allocation1], 34
    %398 = vst [vmem:[%s397] ss:$4 sm:$0xff] %v376
    %s399 = scalar_lea.vmem [#allocation1], 35
    %400 = vst [vmem:[%s399] ss:$4 sm:$0xff] %v377
    %v401 = vld.sshfl [vmem:[#allocation1] sm:$0xff pattern:$0x73625140]
    %v402 = vld.sshfl [vmem:[#allocation1 + $0x20] sm:$0xff pattern:$0x73625140]
    %v403 = vsel %vm105, %v401, 0
    %v405 = vsel %vm105, %v402, 0
    %407 = vmatpush.msra.mxu0 0.0
    %408 = vmatpush.msra.mxu0 0.0
    %409 = vmatpush.msra.mxu0 0.0
    %410 = vmatpush.msra.mxu0 0.0
    %411 = vmatpush.msra.mxu0 0.0
    %412 = vmatpush.msra.mxu0 0.0
    %413 = vmatpush.msra.mxu0 0.0
    %414 = vmatpush.msra.mxu0 0.0
    %415 = vmatpush.msra.mxu0 0.0
    %416 = vmatpush.msra.mxu0 0.0
    %417 = vmatpush.msra.mxu0 0.0
    %418 = vmatpush.msra.mxu0 0.0
    %419 = vmatpush.msra.mxu0 %v258
    %420 = vmatpush.msra.mxu0 %v257
    %421 = vmatpush.msra.mxu0 %v256
    %422 = vmatpush.msra.mxu0 %v255
    %423 = vmatmul.f32.gmra.mxu0 %v403
    %v424 = vpop.f32.mrf.mxu0
    %v425 = vadd.f32 0.0, %v424
    %426 = vmatmul.f32.gmra.mxu0 %v405
    %v427 = vpop.f32.mrf.mxu0
    %v428 = vadd.f32 0.0, %v427
    %429 = vdwg.mxu0
    %v430 = vmul.f32 %v425, 0.35355338
    %v431 = vmul.f32 %v428, 0.35355338
    %432 = vrot.lane.b32.xlu0 %v124, 96
    %v433 = vpop.permute.xlu0 %432
    %434 = vrot.lane.b32.xlu0 %v139, 96
    %v435 = vpop.permute.xlu0 %434
    %v438 = vmul.f32 %v150, %v263
    %v439 = vmul.f32 %v153, %v265
    %v440 = vmul.f32 %v156, %v267
    %v441 = vmul.f32 %v159, %v433
    %v442 = vmul.f32 %v163, %v271
    %v443 = vmul.f32 %v166, %v273
    %v444 = vmul.f32 %v169, %v275
    %v445 = vmul.f32 %v172, %v435
    %454 = vst [vmem:[#allocation1] ss:$4 sm:$0xff] %v438
    %s455 = scalar_lea.vmem [#allocation1], 1
    %456 = vst [vmem:[%s455] ss:$4 sm:$0xff] %v439
    %s457 = scalar_lea.vmem [#allocation1], 2
    %458 = vst [vmem:[%s457] ss:$4 sm:$0xff] %v440
    %s459 = scalar_lea.vmem [#allocation1], 3
    %460 = vst [vmem:[%s459] ss:$4 sm:$0xff] %v441
    %s461 = scalar_lea.vmem [#allocation1], 32
    %462 = vst [vmem:[%s461] ss:$4 sm:$0xff] %v442
    %s463 = scalar_lea.vmem [#allocation1], 33
    %464 = vst [vmem:[%s463] ss:$4 sm:$0xff] %v443
    %s465 = scalar_lea.vmem [#allocation1], 34
    %466 = vst [vmem:[%s465] ss:$4 sm:$0xff] %v444
    %s467 = scalar_lea.vmem [#allocation1], 35
    %468 = vst [vmem:[%s467] ss:$4 sm:$0xff] %v445
    %v469 = vld.sshfl [vmem:[#allocation1] sm:$0xff pattern:$0x73625140]
    %v470 = vld.sshfl [vmem:[#allocation1 + $0x20] sm:$0xff pattern:$0x73625140]
    %v471 = vsel %vm105, %v469, 0
    %v473 = vsel %vm105, %v470, 0
    %475 = vmatpush.msra.mxu0 0.0
    %476 = vmatpush.msra.mxu0 0.0
    %477 = vmatpush.msra.mxu0 0.0
    %478 = vmatpush.msra.mxu0 0.0
    %479 = vmatpush.msra.mxu0 0.0
    %480 = vmatpush.msra.mxu0 0.0
    %481 = vmatpush.msra.mxu0 0.0
    %482 = vmatpush.msra.mxu0 0.0
    %483 = vmatpush.msra.mxu0 0.0
    %484 = vmatpush.msra.mxu0 0.0
    %485 = vmatpush.msra.mxu0 0.0
    %486 = vmatpush.msra.mxu0 0.0
    %487 = vmatpush.msra.mxu0 %v258
    %488 = vmatpush.msra.mxu0 %v257
    %489 = vmatpush.msra.mxu0 %v256
    %490 = vmatpush.msra.mxu0 %v255
    %491 = vmatmul.f32.gmra.mxu0 %v471
    %v492 = vpop.f32.mrf.mxu0
    %v493 = vadd.f32 0.0, %v492
    %494 = vmatmul.f32.gmra.mxu0 %v473
    %v495 = vpop.f32.mrf.mxu0
    %v496 = vadd.f32 0.0, %v495
    %497 = vdwg.mxu0
    %v498 = vmul.f32 %v493, 0.35355338
    %v499 = vmul.f32 %v496, 0.35355338
    %v502 = vrot.slane %v217, 2
    %v503 = vrot.slane %v217, 4
    %v504 = vrot.slane %v217, 6
    %v505 = vrot.slane %v219, 2
    %v506 = vrot.slane %v219, 4
    %v507 = vrot.slane %v219, 6
    %v514 = vmul.f32 %v150, %v217
    %v515 = vmul.f32 %v153, %v502
    %v516 = vmul.f32 %v156, %v503
    %v517 = vmul.f32 %v159, %v504
    %v518 = vmul.f32 %v163, %v219
    %v519 = vmul.f32 %v166, %v505
    %v520 = vmul.f32 %v169, %v506
    %v521 = vmul.f32 %v172, %v507
    %530 = vst [vmem:[#allocation1] ss:$4 sm:$0xff] %v514
    %s531 = scalar_lea.vmem [#allocation1], 1
    %532 = vst [vmem:[%s531] ss:$4 sm:$0xff] %v515
    %s533 = scalar_lea.vmem [#allocation1], 2
    %534 = vst [vmem:[%s533] ss:$4 sm:$0xff] %v516
    %s535 = scalar_lea.vmem [#allocation1], 3
    %536 = vst [vmem:[%s535] ss:$4 sm:$0xff] %v517
    %s537 = scalar_lea.vmem [#allocation1], 32
    %538 = vst [vmem:[%s537] ss:$4 sm:$0xff] %v518
    %s539 = scalar_lea.vmem [#allocation1], 33
    %540 = vst [vmem:[%s539] ss:$4 sm:$0xff] %v519
    %s541 = scalar_lea.vmem [#allocation1], 34
    %542 = vst [vmem:[%s541] ss:$4 sm:$0xff] %v520
    %s543 = scalar_lea.vmem [#allocation1], 35
    %544 = vst [vmem:[%s543] ss:$4 sm:$0xff] %v521
    %v545 = vld.sshfl [vmem:[#allocation1] sm:$0xff pattern:$0x73625140]
    %v546 = vld.sshfl [vmem:[#allocation1 + $0x20] sm:$0xff pattern:$0x73625140]
    %v547 = vsel %vm105, %v545, 0
    %v549 = vsel %vm105, %v546, 0
    %551 = vmatpush.msra.mxu0 0.0
    %552 = vmatpush.msra.mxu0 0.0
    %553 = vmatpush.msra.mxu0 0.0
    %554 = vmatpush.msra.mxu0 0.0
    %555 = vmatpush.msra.mxu0 0.0
    %556 = vmatpush.msra.mxu0 0.0
    %557 = vmatpush.msra.mxu0 0.0
    %558 = vmatpush.msra.mxu0 0.0
    %559 = vmatpush.msra.mxu0 0.0
    %560 = vmatpush.msra.mxu0 0.0
    %561 = vmatpush.msra.mxu0 0.0
    %562 = vmatpush.msra.mxu0 0.0
    %563 = vmatpush.msra.mxu0 %v258
    %564 = vmatpush.msra.mxu0 %v257
    %565 = vmatpush.msra.mxu0 %v256
    %566 = vmatpush.msra.mxu0 %v255
    %567 = vmatmul.f32.gmra.mxu0 %v547
    %v568 = vpop.f32.mrf.mxu0
    %v569 = vadd.f32 0.0, %v568
    %570 = vmatmul.f32.gmra.mxu0 %v549
    %v571 = vpop.f32.mrf.mxu0
    %v572 = vadd.f32 0.0, %v571
    %573 = vdwg.mxu0
    %v574 = vmul.f32 %v569, 0.35355338
    %v575 = vmul.f32 %v572, 0.35355338
    %v576 = vrot.slane %v251, 2
    %v577 = vrot.slane %v251, 4
    %v578 = vrot.slane %v251, 6
    %v579 = vrot.slane %v252, 2
    %v580 = vrot.slane %v252, 4
    %v581 = vrot.slane %v252, 6
    %v588 = vmul.f32 %v150, %v251
    %v589 = vmul.f32 %v153, %v576
    %v590 = vmul.f32 %v156, %v577
    %v591 = vmul.f32 %v159, %v578
    %v592 = vmul.f32 %v163, %v252
    %v593 = vmul.f32 %v166, %v579
    %v594 = vmul.f32 %v169, %v580
    %v595 = vmul.f32 %v172, %v581
    %604 = vst [vmem:[#allocation1] ss:$4 sm:$0xff] %v588
    %s605 = scalar_lea.vmem [#allocation1], 1
    %606 = vst [vmem:[%s605] ss:$4 sm:$0xff] %v589
    %s607 = scalar_lea.vmem [#allocation1], 2
    %608 = vst [vmem:[%s607] ss:$4 sm:$0xff] %v590
    %s609 = scalar_lea.vmem [#allocation1], 3
    %610 = vst [vmem:[%s609] ss:$4 sm:$0xff] %v591
    %s611 = scalar_lea.vmem [#allocation1], 32
    %612 = vst [vmem:[%s611] ss:$4 sm:$0xff] %v592
    %s613 = scalar_lea.vmem [#allocation1], 33
    %614 = vst [vmem:[%s613] ss:$4 sm:$0xff] %v593
    %s615 = scalar_lea.vmem [#allocation1], 34
    %616 = vst [vmem:[%s615] ss:$4 sm:$0xff] %v594
    %s617 = scalar_lea.vmem [#allocation1], 35
    %618 = vst [vmem:[%s617] ss:$4 sm:$0xff] %v595
    %v619 = vld.sshfl [vmem:[#allocation1] sm:$0xff pattern:$0x73625140]
    %v620 = vld.sshfl [vmem:[#allocation1 + $0x20] sm:$0xff pattern:$0x73625140]
    %v621 = vsel %vm105, %v619, 0
    %v623 = vsel %vm105, %v620, 0
    %625 = vmatpush.msra.mxu0 0.0
    %626 = vmatpush.msra.mxu0 0.0
    %627 = vmatpush.msra.mxu0 0.0
    %628 = vmatpush.msra.mxu0 0.0
    %629 = vmatpush.msra.mxu0 0.0
    %630 = vmatpush.msra.mxu0 0.0
    %631 = vmatpush.msra.mxu0 0.0
    %632 = vmatpush.msra.mxu0 0.0
    %633 = vmatpush.msra.mxu0 0.0
    %634 = vmatpush.msra.mxu0 0.0
    %635 = vmatpush.msra.mxu0 0.0
    %636 = vmatpush.msra.mxu0 0.0
    %637 = vmatpush.msra.mxu0 %v258
    %638 = vmatpush.msra.mxu0 %v257
    %639 = vmatpush.msra.mxu0 %v256
    %640 = vmatpush.msra.mxu0 %v255
    %641 = vmatmul.f32.gmra.mxu0 %v621
    %v642 = vpop.f32.mrf.mxu0
    %v643 = vadd.f32 0.0, %v642
    %644 = vmatmul.f32.gmra.mxu0 %v623
    %v645 = vpop.f32.mrf.mxu0
    %v646 = vadd.f32 0.0, %v645
    %647 = vdwg.mxu0
    %v648 = vmul.f32 %v643, 0.35355338
    %v649 = vmul.f32 %v646, 0.35355338
    %v650 = vmax.f32 %v344, %v430
    %v651 = vmax.f32 %v345, %v431
    %v652 = vmax.f32 %v650, %v498
    %v653 = vmax.f32 %v651, %v499
    %v654 = vmax.f32 %v652, %v574
    %v655 = vmax.f32 %v653, %v575
    %v656 = vmax.f32 %v654, %v648
    %v657 = vmax.f32 %v655, %v649
    %v658 = vsub.f32 %v344, %v656
    %v659 = vsub.f32 %v345, %v657
    %v660 = vmul.f32 %v658, 1.442695
    %v661 = vpow.pop %v660
    %v662 = vmul.f32 %v659, 1.442695
    %v663 = vpow.pop %v662
    %v664 = vsub.f32 %v430, %v656
    %v665 = vsub.f32 %v431, %v657
    %v666 = vmul.f32 %v664, 1.442695
    %v667 = vpow.pop %v666
    %v668 = vmul.f32 %v665, 1.442695
    %v669 = vpow.pop %v668
    %v670 = vsub.f32 %v498, %v656
    %v671 = vsub.f32 %v499, %v657
    %v672 = vmul.f32 %v670, 1.442695
    %v673 = vpow.pop %v672
    %v674 = vmul.f32 %v671, 1.442695
    %v675 = vpow.pop %v674
    %v676 = vsub.f32 %v574, %v656
    %v677 = vsub.f32 %v575, %v657
    %v678 = vmul.f32 %v676, 1.442695
    %v679 = vpow.pop %v678
    %v680 = vmul.f32 %v677, 1.442695
    %v681 = vpow.pop %v680
    %v682 = vsub.f32 %v648, %v656
    %v683 = vsub.f32 %v649, %v657
    %v684 = vmul.f32 %v682, 1.442695
    %v685 = vpow.pop %v684
    %v686 = vmul.f32 %v683, 1.442695
    %v687 = vpow.pop %v686
    %v688 = vadd.f32 %v661, %v667
    %v689 = vadd.f32 %v663, %v669
    %v690 = vadd.f32 %v688, %v673
    %v691 = vadd.f32 %v689, %v675
    %v692 = vadd.f32 %v690, %v679
    %v693 = vadd.f32 %v691, %v681
    %v694 = vadd.f32 %v692, %v685
    %v695 = vadd.f32 %v693, %v687
    %v696 = vrcp.pop %v694
    %v697 = vrcp.pop %v695
    %v698 = vmul.f32 %v661, %v696
    %v699 = vmul.f32 %v663, %v697
    %vm700 = vcmask 31744
    %v702 = vsel %vm700, %v698, 0
    %v705 = vsel %vm700, %v699, 0
    %vm707 = vcmask 1043456
    %v709 = vsel %vm707, %v259, 0
    %711 = vmatpush.msra.mxu0 0.0
    %712 = vmatpush.msra.mxu0 0.0
    %713 = vmatpush.msra.mxu0 0.0
    %714 = vmatpush.msra.mxu0 0.0
    %715 = vmatpush.msra.mxu0 0.0
    %716 = vmatpush.msra.mxu0 0.0
    %717 = vmatpush.msra.mxu0 0.0
    %718 = vmatpush.msra.mxu0 0.0
    %719 = vmatpush.msra.mxu0 0.0
    %720 = vmatpush.msra.mxu0 0.0
    %721 = vmatpush.msra.mxu0 0.0
    %722 = vmatpush.msra.mxu0 0.0
    %723 = vmatpush.msra.mxu0 0.0
    %724 = vmatpush.msra.mxu0 0.0
    %725 = vmatpush.msra.mxu0 0.0
    %726 = vmatpush.msra.mxu0 %v709
    %727 = vmatmul.f32.gmra.mxu0 %v702
    %v728 = vpop.f32.mrf.mxu0
    %v729 = vadd.f32 0.0, %v728
    %730 = vmatmul.f32.gmra.mxu0 %v705
    %v731 = vpop.f32.mrf.mxu0
    %v732 = vadd.f32 0.0, %v731
    %733 = vdwg.mxu0
    %734 = vst [vmem:[#allocation1] ss:$4 sm:$0xff] %v122
    %s735 = scalar_lea.vmem [#allocation1], 1
    %736 = vst [vmem:[%s735] ss:$4 sm:$0xff] %v133
    %s737 = scalar_lea.vmem [#allocation1], 2
    %738 = vst [vmem:[%s737] ss:$4 sm:$0xff] %v134
    %s739 = scalar_lea.vmem [#allocation1], 3
    %740 = vst [vmem:[%s739] ss:$4 sm:$0xff] %v135
    %s741 = scalar_lea.vmem [#allocation1], 32
    %742 = vst [vmem:[%s741] ss:$4 sm:$0xff] %v136
    %s743 = scalar_lea.vmem [#allocation1], 33
    %744 = vst [vmem:[%s743] ss:$4 sm:$0xff] %v137
    %s745 = scalar_lea.vmem [#allocation1], 34
    %746 = vst [vmem:[%s745] ss:$4 sm:$0xff] %v138
    %s747 = scalar_lea.vmem [#allocation1], 35
    %748 = vst [vmem:[%s747] ss:$4 sm:$0xff] %v127
    %v749 = vld.sshfl [vmem:[#allocation1] sm:$0xff pattern:$0x73625140]
    %v750 = vld.sshfl [vmem:[#allocation1 + $0x20] sm:$0xff pattern:$0x73625140]
    %751 = vrot.lane.b32.xlu0 %v749, 64
    %v752 = vpop.permute.xlu0 %751
    %753 = vrot.lane.b32.xlu0 %v750, 64
    %v754 = vpop.permute.xlu0 %753
    %v757 = vmul.f32 %v729, %v752
    %v758 = vmul.f32 %v732, %v754
    %v759 = vadd.f32 %v757, 0.0
    %v760 = vadd.f32 %v758, 0.0
    %v761 = vmul.f32 %v667, %v696
    %v762 = vmul.f32 %v669, %v697
    %v764 = vsel %vm700, %v761, 0
    %v767 = vsel %vm700, %v762, 0
    %769 = vmatpush.msra.mxu0 0.0
    %770 = vmatpush.msra.mxu0 0.0
    %771 = vmatpush.msra.mxu0 0.0
    %772 = vmatpush.msra.mxu0 0.0
    %773 = vmatpush.msra.mxu0 0.0
    %774 = vmatpush.msra.mxu0 0.0
    %775 = vmatpush.msra.mxu0 0.0
    %776 = vmatpush.msra.mxu0 0.0
    %777 = vmatpush.msra.mxu0 0.0
    %778 = vmatpush.msra.mxu0 0.0
    %779 = vmatpush.msra.mxu0 0.0
    %780 = vmatpush.msra.mxu0 0.0
    %781 = vmatpush.msra.mxu0 0.0
    %782 = vmatpush.msra.mxu0 0.0
    %783 = vmatpush.msra.mxu0 0.0
    %784 = vmatpush.msra.mxu0 %v709
    %785 = vmatmul.f32.gmra.mxu0 %v764
    %v786 = vpop.f32.mrf.mxu0
    %v787 = vadd.f32 0.0, %v786
    %788 = vmatmul.f32.gmra.mxu0 %v767
    %v789 = vpop.f32.mrf.mxu0
    %v790 = vadd.f32 0.0, %v789
    %791 = vdwg.mxu0
    %792 = vst [vmem:[#allocation1] ss:$4 sm:$0xff] %v150
    %s793 = scalar_lea.vmem [#allocation1], 1
    %794 = vst [vmem:[%s793] ss:$4 sm:$0xff] %v153
    %s795 = scalar_lea.vmem [#allocation1], 2
    %796 = vst [vmem:[%s795] ss:$4 sm:$0xff] %v156
    %s797 = scalar_lea.vmem [#allocation1], 3
    %798 = vst [vmem:[%s797] ss:$4 sm:$0xff] %v159
    %s799 = scalar_lea.vmem [#allocation1], 32
    %800 = vst [vmem:[%s799] ss:$4 sm:$0xff] %v163
    %s801 = scalar_lea.vmem [#allocation1], 33
    %802 = vst [vmem:[%s801] ss:$4 sm:$0xff] %v166
    %s803 = scalar_lea.vmem [#allocation1], 34
    %804 = vst [vmem:[%s803] ss:$4 sm:$0xff] %v169
    %s805 = scalar_lea.vmem [#allocation1], 35
    %806 = vst [vmem:[%s805] ss:$4 sm:$0xff] %v172
    %v807 = vld.sshfl [vmem:[#allocation1] sm:$0xff pattern:$0x73625140]
    %v808 = vld.sshfl [vmem:[#allocation1 + $0x20] sm:$0xff pattern:$0x73625140]
    %809 = vrot.lane.b32.xlu0 %v807, 64
    %v810 = vpop.permute.xlu0 %809
    %811 = vrot.lane.b32.xlu0 %v808, 64
    %v812 = vpop.permute.xlu0 %811
    %v815 = vmul.f32 %v787, %v810
    %v816 = vmul.f32 %v790, %v812
    %v817 = vadd.f32 %v759, %v815
    %v818 = vadd.f32 %v760, %v816
    %v819 = vmul.f32 %v673, %v696
    %v820 = vmul.f32 %v675, %v697
    %v822 = vsel %vm700, %v819, 0
    %v825 = vsel %vm700, %v820, 0
    %827 = vmatpush.msra.mxu0 0.0
    %828 = vmatpush.msra.mxu0 0.0
    %829 = vmatpush.msra.mxu0 0.0
    %830 = vmatpush.msra.mxu0 0.0
    %831 = vmatpush.msra.mxu0 0.0
    %832 = vmatpush.msra.mxu0 0.0
    %833 = vmatpush.msra.mxu0 0.0
    %834 = vmatpush.msra.mxu0 0.0
    %835 = vmatpush.msra.mxu0 0.0
    %836 = vmatpush.msra.mxu0 0.0
    %837 = vmatpush.msra.mxu0 0.0
    %838 = vmatpush.msra.mxu0 0.0
    %839 = vmatpush.msra.mxu0 0.0
    %840 = vmatpush.msra.mxu0 0.0
    %841 = vmatpush.msra.mxu0 0.0
    %842 = vmatpush.msra.mxu0 %v709
    %843 = vmatmul.f32.gmra.mxu0 %v822
    %v844 = vpop.f32.mrf.mxu0
    %v845 = vadd.f32 0.0, %v844
    %846 = vmatmul.f32.gmra.mxu0 %v825
    %v847 = vpop.f32.mrf.mxu0
    %v848 = vadd.f32 0.0, %v847
    %849 = vdwg.mxu0
    %850 = vst [vmem:[#allocation1] ss:$4 sm:$0xff] %v133
    %s851 = scalar_lea.vmem [#allocation1], 1
    %852 = vst [vmem:[%s851] ss:$4 sm:$0xff] %v134
    %s853 = scalar_lea.vmem [#allocation1], 2
    %854 = vst [vmem:[%s853] ss:$4 sm:$0xff] %v135
    %s855 = scalar_lea.vmem [#allocation1], 3
    %856 = vst [vmem:[%s855] ss:$4 sm:$0xff] %v124
    %s857 = scalar_lea.vmem [#allocation1], 32
    %858 = vst [vmem:[%s857] ss:$4 sm:$0xff] %v137
    %s859 = scalar_lea.vmem [#allocation1], 33
    %860 = vst [vmem:[%s859] ss:$4 sm:$0xff] %v138
    %s861 = scalar_lea.vmem [#allocation1], 34
    %862 = vst [vmem:[%s861] ss:$4 sm:$0xff] %v127
    %s863 = scalar_lea.vmem [#allocation1], 35
    %864 = vst [vmem:[%s863] ss:$4 sm:$0xff] %v139
    %v865 = vld.sshfl [vmem:[#allocation1] sm:$0xff pattern:$0x73625140]
    %v866 = vld.sshfl [vmem:[#allocation1 + $0x20] sm:$0xff pattern:$0x73625140]
    %867 = vrot.lane.b32.xlu0 %v865, 64
    %v868 = vpop.permute.xlu0 %867
    %869 = vrot.lane.b32.xlu0 %v866, 64
    %v870 = vpop.permute.xlu0 %869
    %v873 = vmul.f32 %v845, %v868
    %v874 = vmul.f32 %v848, %v870
    %v875 = vadd.f32 %v817, %v873
    %v876 = vadd.f32 %v818, %v874
    %v877 = vmul.f32 %v679, %v696
    %v878 = vmul.f32 %v681, %v697
    %v880 = vsel %vm700, %v877, 0
    %v883 = vsel %vm700, %v878, 0
    %885 = vmatpush.msra.mxu0 0.0
    %886 = vmatpush.msra.mxu0 0.0
    %887 = vmatpush.msra.mxu0 0.0
    %888 = vmatpush.msra.mxu0 0.0
    %889 = vmatpush.msra.mxu0 0.0
    %890 = vmatpush.msra.mxu0 0.0
    %891 = vmatpush.msra.mxu0 0.0
    %892 = vmatpush.msra.mxu0 0.0
    %893 = vmatpush.msra.mxu0 0.0
    %894 = vmatpush.msra.mxu0 0.0
    %895 = vmatpush.msra.mxu0 0.0
    %896 = vmatpush.msra.mxu0 0.0
    %897 = vmatpush.msra.mxu0 0.0
    %898 = vmatpush.msra.mxu0 0.0
    %899 = vmatpush.msra.mxu0 0.0
    %900 = vmatpush.msra.mxu0 %v709
    %901 = vmatmul.f32.gmra.mxu0 %v880
    %v902 = vpop.f32.mrf.mxu0
    %v903 = vadd.f32 0.0, %v902
    %904 = vmatmul.f32.gmra.mxu0 %v883
    %v905 = vpop.f32.mrf.mxu0
    %v906 = vadd.f32 0.0, %v905
    %907 = vdwg.mxu0
    %908 = vrot.lane.b32.xlu0 %v217, 96
    %v909 = vpop.permute.xlu0 %908
    %910 = vrot.lane.b32.xlu0 %v219, 96
    %v911 = vpop.permute.xlu0 %910
    %v914 = vmul.f32 %v903, %v909
    %v915 = vmul.f32 %v906, %v911
    %v916 = vadd.f32 %v875, %v914
    %v917 = vadd.f32 %v876, %v915
    %v918 = vmul.f32 %v685, %v696
    %v919 = vmul.f32 %v687, %v697
    %v921 = vsel %vm700, %v918, 0
    %v924 = vsel %vm700, %v919, 0
    %926 = vmatpush.msra.mxu0 0.0
    %927 = vmatpush.msra.mxu0 0.0
    %928 = vmatpush.msra.mxu0 0.0
    %929 = vmatpush.msra.mxu0 0.0
    %930 = vmatpush.msra.mxu0 0.0
    %931 = vmatpush.msra.mxu0 0.0
    %932 = vmatpush.msra.mxu0 0.0
    %933 = vmatpush.msra.mxu0 0.0
    %934 = vmatpush.msra.mxu0 0.0
    %935 = vmatpush.msra.mxu0 0.0
    %936 = vmatpush.msra.mxu0 0.0
    %937 = vmatpush.msra.mxu0 0.0
    %938 = vmatpush.msra.mxu0 0.0
    %939 = vmatpush.msra.mxu0 0.0
    %940 = vmatpush.msra.mxu0 0.0
    %941 = vmatpush.msra.mxu0 %v709
    %942 = vmatmul.f32.gmra.mxu0 %v921
    %v943 = vpop.f32.mrf.mxu0
    %v944 = vadd.f32 0.0, %v943
    %945 = vmatmul.f32.gmra.mxu0 %v924
    %v946 = vpop.f32.mrf.mxu0
    %v947 = vadd.f32 0.0, %v946
    %948 = vdwg.mxu0
    %949 = vrot.lane.b32.xlu0 %v251, 96
    %v950 = vpop.permute.xlu0 %949
    %951 = vrot.lane.b32.xlu0 %v252, 96
    %v952 = vpop.permute.xlu0 %951
    %v955 = vmul.f32 %v944, %v950
    %v956 = vmul.f32 %v947, %v952
    %v957 = vadd.f32 %v916, %v955
    %v958 = vadd.f32 %v917, %v956
    %v959 = vpack.c.bf16 %v958, %v957
    %v960 = vld [vmem:[%s7] sm:$0xf]
    %v961 = vld [vmem:[%s7 + $0x4] sm:$0xf]
    %v962 = vld [vmem:[%s7 + $0x8] sm:$0xf]
    %v963 = vld [vmem:[%s7 + $0xc] sm:$0xf]
    %v964 = vld [vmem:[%s8] sm:$0x1]
    %v966 = vperm.slane %v964, 0
    %v972 = vunpack.c.l.b16 %v960
    %v973 = vunpack.c.l.b16 %v961
    %v974 = vunpack.c.l.b16 %v962
    %v975 = vunpack.c.l.b16 %v963
    %v976 = vpack.c.b16 %v973, %v972
    %v977 = vpack.c.b16 %v975, %v974
    %v981 = vsel %vm105, %v959, 0
    %983 = vmatpush.bf16.msra.mxu0 0
    %984 = vmatpush.bf16.msra.mxu0 0
    %985 = vmatpush.bf16.msra.mxu0 0
    %986 = vmatpush.bf16.msra.mxu0 0
    %987 = vmatpush.bf16.msra.mxu0 0
    %988 = vmatpush.bf16.msra.mxu0 0
    %989 = vmatpush.bf16.msra.mxu0 %v977
    %990 = vmatpush.bf16.msra.mxu0 %v976
    %991 = vmatmul.bf16.gmra.mxu0 %v981
    %v992 = vpop.f32.mrf.mxu0
    %v993 = vadd.f32 %v966, %v992
    %v994 = vpop.f32.mrf.mxu0
    %v995 = vadd.f32 %v966, %v994
    %996 = vdwg.mxu0
    %v997 = vmax.f32 %v993, 0.0
    %v998 = vmax.f32 %v995, 0.0
    %v999 = vsel %vm105, %v997, 0.0
    %1000 = vadd.xlane.f32.xlu0 %v999
    %v1001 = vpop.xlane.xlu0 %1000
    %v1002 = vsel %vm105, %v998, 0.0
    %1003 = vadd.xlane.f32.xlu0 %v1002
    %v1004 = vpop.xlane.xlu0 %1003
    %v1005 = vrcp.pop 32.0
    %v1006 = vmul.f32 32.0, %v1005
    %v1007 = vsub.f32 1.0, %v1006
    %v1008 = vmul.f32 %v1005, %v1007
    %v1009 = vadd.f32 %v1005, %v1008
    %vm1010 = vweird.f32 %v1005
    %v1011 = vsel %vm1010, %v1005, %v1009
    %v1012 = vmul.f32 %v1001, %v1011
    %v1013 = vmul.f32 %v1004, %v1011
    %v1014 = vsub.f32 %v997, %v1012
    %v1015 = vsub.f32 %v998, %v1013
    %v1016 = vmul.f32 %v1014, %v1014
    %v1017 = vmul.f32 %v1015, %v1015
    %v1018 = vsel %vm105, %v1016, 0.0
    %1019 = vadd.xlane.f32.xlu0 %v1018
    %v1020 = vpop.xlane.xlu0 %1019
    %v1021 = vsel %vm105, %v1017, 0.0
    %1022 = vadd.xlane.f32.xlu0 %v1021
    %v1023 = vpop.xlane.xlu0 %1022
    %v1024 = vmul.f32 %v1020, %v1011
    %v1025 = vmul.f32 %v1023, %v1011
    %v1026 = vadd.f32 %v1024, 1e-05
    %v1027 = vadd.f32 %v1025, 1e-05
    %v1028 = vrsqrt.pop %v1026
    %v1029 = vmul.f32 %v1028, %v1026
    %v1030 = vmul.f32 %v1029, %v1028
    %v1031 = vmul.f32 0.5, %v1030
    %v1032 = vsub.f32 1.5, %v1031
    %v1033 = vmul.f32 %v1028, %v1032
    %vm1034 = vweird.f32 %v1026
    %vm1035 = vweird.f32 %v1028
    %vm1036 = vmor %vm1034, %vm1035
    %v1037 = vsel %vm1036, %v1028, %v1033
    %v1038 = vrsqrt.pop %v1027
    %v1039 = vmul.f32 %v1038, %v1027
    %v1040 = vmul.f32 %v1039, %v1038
    %v1041 = vmul.f32 0.5, %v1040
    %v1042 = vsub.f32 1.5, %v1041
    %v1043 = vmul.f32 %v1038, %v1042
    %vm1044 = vweird.f32 %v1027
    %vm1045 = vweird.f32 %v1038
    %vm1046 = vmor %vm1044, %vm1045
    %v1047 = vsel %vm1046, %v1038, %v1043
    %v1048 = vmul.f32 %v1014, %v1037
    %v1049 = vmul.f32 %v1015, %v1047
    %v1050 = vld [vmem:[%s9] sm:$0x1]
    %v1052 = vperm.slane %v1050, 0
    %v1054 = vmul.f32 %v1048, %v1052
    %v1055 = vmul.f32 %v1049, %v1052
    %v1056 = vld [vmem:[%s10] sm:$0x1]
    %v1058 = vperm.slane %v1056, 0
    %v1060 = vadd.f32 %v1054, %v1058
    %v1061 = vadd.f32 %v1055, %v1058
    %1062 = vst.msk [vmem:[#allocation2] sm:$0xff] %vm105, %v1060
    %1063 = vst.msk [vmem:[#allocation2 + $0x8] sm:$0xff] %vm105, %v1061
    // Predicated region
    $region54: #{tpu_custom_call.1} parent=1 // pred_check
      _
    $region55: #{tpu_custom_call.1} parent=1 // pred_check_branch
      %1065 = sbr.rel (0) target = $region57
    $region56: #{tpu_custom_call.1} parent=1 // pred_region
      %1067 = vsyncadd [#allocation3], 0
      %s1068 = sshll.u32 [#allocation2], 4
      %s1069 = int_to_ptr.vmem [resolvable:$true] %s1068
      %s1070 = sshll.u32 %s13, 4
      %s1071 = int_to_ptr.hbm [resolvable:$true] %s1070
      %1076 = dma.vmem_to_hbm [thread:$0]  %s1069, 256, %s1071, [#allocation3], 128, 128, 8
    $region57: #{tpu_custom_call.1} parent=1 // pred_fallthru
      _
    // Predicated region
    $region58: #{tpu_custom_call.1} parent=1 // pred_check
      _
    $region59: #{tpu_custom_call.1} parent=1 // pred_check_branch
      %1078 = sbr.rel (0) target = $region61
    $region60: #{tpu_custom_call.1} parent=1 // pred_region
      %1080 = dma.done [#allocation3], 256
    $region61: #{tpu_custom_call.1} parent=1 // pred_fallthru
      _
    %1081 = vsyncpa [#allocation3], 1

</llo_original>
